<compile_context>
chip_gen: v7x
topology: tpu7x:2x2x1
jax: 0.10.0
libtpu: 0.0.40
codegen_flags: <defaults>
</compile_context>

<pallas_src>
import functools

import jax
import jax.numpy as jnp
from jax import lax
from jax.experimental import pallas as pl
from jax.experimental.pallas import tpu as pltpu


def _cgne_kernel(x0_ref, rhs_ref, a_ref, out_ref, *, niter, correction_factor):
    A = a_ref[...]                              # (M, N), stays VMEM/vreg resident
    x = x0_ref[...].astype(jnp.float32)         # (B, N)
    rhs = rhs_ref[...].astype(jnp.float32)      # (B, M)

    # op(v)      = v @ A^T : contract v's last dim with A's last dim  -> (B, M)
    # adjoint(d) = d @ A   : contract d's last dim with A's first dim -> (B, N)
    dn_op = (((1,), (1,)), ((), ()))
    dn_adj = (((1,), (0,)), ((), ()))

    def op(v):
        return lax.dot_general(v, A, dn_op, preferred_element_type=jnp.float32)

    def adjoint(d):
        return lax.dot_general(d, A, dn_adj, preferred_element_type=jnp.float32)

    d0 = rhs - op(x)          # (B, M)
    p0 = adjoint(d0)          # (B, N)
    s0 = p0
    ss0 = jnp.sum(s0 * s0)    # carried scalar: ||s||^2 (global over batch, like torch .norm())

    def body(_, carry):
        x0, d0, p0, ss0 = carry
        q0 = op(p0)
        alpha = ss0 / jnp.sum(q0 * q0) * correction_factor
        x0 = x0 + alpha * p0
        d0 = d0 - alpha * q0
        s1 = adjoint(d0)
        ss1 = jnp.sum(s1 * s1)
        beta = ss1 / ss0
        p0 = s1 + beta * p0
        return (x0, d0, p0, ss1)

    x, _, _, _ = lax.fori_loop(0, niter, body, (x, d0, p0, ss0), unroll=True)
    out_ref[...] = x.astype(out_ref.dtype)


def _pad_to(x, multiples):
    pads = []
    for dim, m in zip(x.shape, multiples):
        target = ((dim + m - 1) // m) * m
        pads.append((0, target - dim))
    if any(p[1] for p in pads):
        return jnp.pad(x, pads)
    return x


def cgne(x0, rhs, A, *, niter=10, correction_factor=1.0):
    """Runs the full CGNE iteration inside one Pallas kernel (everything VMEM-resident)."""
    B, N = x0.shape
    M = rhs.shape[1]
    assert A.shape == (M, N)

    # Zero-pad to TPU-friendly shapes (exact: padding contributes 0 to all
    # matvecs and global norms, and the padded output region is sliced off).
    x0_p = _pad_to(x0.astype(jnp.float32), (8, 128))
    rhs_p = _pad_to(rhs.astype(jnp.float32), (8, 128))
    A_p = _pad_to(A.astype(jnp.float32), (128, 128))
    Bp, Np = x0_p.shape
    Mp = rhs_p.shape[1]

    kernel = functools.partial(
        _cgne_kernel, niter=int(niter), correction_factor=float(correction_factor)
    )
    out = pl.pallas_call(
        kernel,
        out_shape=jax.ShapeDtypeStruct((Bp, Np), jnp.float32),
        in_specs=[
            pl.BlockSpec((Bp, Np), lambda: (0, 0)),
            pl.BlockSpec((Bp, Mp), lambda: (0, 0)),
            pl.BlockSpec((Mp, Np), lambda: (0, 0)),
        ],
        out_specs=pl.BlockSpec((Bp, Np), lambda: (0, 0)),
        compiler_params=pltpu.CompilerParams(vmem_limit_bytes=48 << 20),
    )(x0_p, rhs_p, A_p)
    return out[:B, :N]


def cgne_ref(x0, rhs, A, *, niter=10, correction_factor=1.0):
    """Pure-JAX reference matching the PyTorch forward pass semantics."""
    op = lambda v: v @ A.T
    adjoint = lambda d: d @ A
    d0 = rhs - op(x0)
    p0 = adjoint(d0)
    s0 = p0
    for _ in range(niter):
        q0 = op(p0)
        alpha = jnp.sum(s0 * s0) / jnp.sum(q0 * q0) * correction_factor
        x0 = x0 + alpha * p0
        d0 = d0 - alpha * q0
        s1 = adjoint(d0)
        beta = jnp.sum(s1 * s1) / jnp.sum(s0 * s0)
        p0 = s1 + beta * p0
        s0 = s1
    return x0


if __name__ == "__main__":
    # Deterministic synthetic problem: B batch rows, domain dim N, range dim M.
    B, N, M = 8, 128, 128
    NITER = 10
    CORRECTION = 1.0  # domain.weighting.const / range.weighting.const (synthetic operator)

    key = jax.random.PRNGKey(0)
    k1, k2, k3 = jax.random.split(key, 3)
    # Well-conditioned operator: identity + small random perturbation.
    A = jnp.eye(M, N, dtype=jnp.float32) + 0.05 * jax.random.normal(k1, (M, N), jnp.float32)
    x0 = jax.random.normal(k2, (B, N), jnp.float32)
    rhs = jax.random.normal(k3, (B, M), jnp.float32)

    out = cgne(x0, rhs, A, niter=NITER, correction_factor=CORRECTION)
    out = jax.block_until_ready(out)

    ref = cgne_ref(x0, rhs, A, niter=NITER, correction_factor=CORRECTION)
    assert jnp.allclose(out, ref, rtol=1e-4, atol=1e-4), "Pallas CGNE mismatch vs reference"

    print("KERNEL_OK")
</pallas_src>

<mosaic_0001>
module attributes {stable_mosaic.version = 11 : i64} {
  func.func @_cgne_kernel(%arg0: memref<8x128xf32, #tpu.memory_space<vmem>>, %arg1: memref<8x128xf32, #tpu.memory_space<vmem>>, %arg2: memref<128x128xf32, #tpu.memory_space<vmem>>, %arg3: memref<8x128xf32, #tpu.memory_space<vmem>>) attributes {dimension_semantics = [], scalar_prefetch = 0 : i64, scratch_operands = 0 : i64, tpu.core_type = #tpu.core_type<tc>} {
    %c0 = arith.constant 0 : index
    %c0_0 = arith.constant 0 : index
    %0 = vector.load %arg2[%c0, %c0_0] : memref<128x128xf32, #tpu.memory_space<vmem>>, vector<128x128xf32>
    %c0_1 = arith.constant 0 : index
    %c0_2 = arith.constant 0 : index
    %1 = vector.load %arg0[%c0_1, %c0_2] : memref<8x128xf32, #tpu.memory_space<vmem>>, vector<8x128xf32>
    %c0_3 = arith.constant 0 : index
    %c0_4 = arith.constant 0 : index
    %2 = vector.load %arg1[%c0_3, %c0_4] : memref<8x128xf32, #tpu.memory_space<vmem>>, vector<8x128xf32>
    %cst = arith.constant dense<0.000000e+00> : vector<8x128xf32>
    %3 = tpu.matmul %1, %0, %cst {dimension_numbers = #tpu.dot_dimension_numbers<[1], [1], [0], [0], [0, 0, 1, 0], [], []>} : vector<8x128xf32>, vector<128x128xf32>, vector<8x128xf32> -> vector<8x128xf32>
    %4 = arith.subf %2, %3 : vector<8x128xf32>
    %cst_5 = arith.constant dense<0.000000e+00> : vector<8x128xf32>
    %5 = tpu.matmul %4, %0, %cst_5 {dimension_numbers = #tpu.dot_dimension_numbers<[1], [0], [0], [1], [0, 0, 1, 1], [], []>} : vector<8x128xf32>, vector<128x128xf32>, vector<8x128xf32> -> vector<8x128xf32>
    %6 = arith.mulf %5, %5 : vector<8x128xf32>
    %7 = vector.shape_cast %6 : vector<8x128xf32> to vector<1x8x128xf32>
    %cst_6 = arith.constant dense<0.000000e+00> : vector<1xf32>
    %8 = vector.multi_reduction <add>, %7, %cst_6 [1, 2] : vector<1x8x128xf32> to vector<1xf32>
    %9 = vector.shape_cast %8 : vector<1xf32> to vector<1x1x1xf32>
    %10 = vector.extract %9[0, 0, 0] : f32 from vector<1x1x1xf32>
    %c0_i32 = arith.constant 0 : i32
    %cst_7 = arith.constant dense<0.000000e+00> : vector<8x128xf32>
    %11 = tpu.matmul %5, %0, %cst_7 {dimension_numbers = #tpu.dot_dimension_numbers<[1], [1], [0], [0], [0, 0, 1, 0], [], []>} : vector<8x128xf32>, vector<128x128xf32>, vector<8x128xf32> -> vector<8x128xf32>
    %12 = arith.mulf %11, %11 : vector<8x128xf32>
    %13 = vector.shape_cast %12 : vector<8x128xf32> to vector<1x8x128xf32>
    %cst_8 = arith.constant dense<0.000000e+00> : vector<1xf32>
    %14 = vector.multi_reduction <add>, %13, %cst_8 [1, 2] : vector<1x8x128xf32> to vector<1xf32>
    %15 = vector.shape_cast %14 : vector<1xf32> to vector<1x1x1xf32>
    %16 = vector.extract %15[0, 0, 0] : f32 from vector<1x1x1xf32>
    %17 = arith.divf %10, %16 : f32
    %cst_9 = arith.constant 1.000000e+00 : f32
    %18 = arith.mulf %17, %cst_9 : f32
    %19 = vector.broadcast %18 : f32 to vector<8x128xf32>
    %20 = arith.mulf %19, %5 : vector<8x128xf32>
    %21 = arith.addf %1, %20 : vector<8x128xf32>
    %22 = vector.broadcast %18 : f32 to vector<8x128xf32>
    %23 = arith.mulf %22, %11 : vector<8x128xf32>
    %24 = arith.subf %4, %23 : vector<8x128xf32>
    %cst_10 = arith.constant dense<0.000000e+00> : vector<8x128xf32>
    %25 = tpu.matmul %24, %0, %cst_10 {dimension_numbers = #tpu.dot_dimension_numbers<[1], [0], [0], [1], [0, 0, 1, 1], [], []>} : vector<8x128xf32>, vector<128x128xf32>, vector<8x128xf32> -> vector<8x128xf32>
    %26 = arith.mulf %25, %25 : vector<8x128xf32>
    %27 = vector.shape_cast %26 : vector<8x128xf32> to vector<1x8x128xf32>
    %cst_11 = arith.constant dense<0.000000e+00> : vector<1xf32>
    %28 = vector.multi_reduction <add>, %27, %cst_11 [1, 2] : vector<1x8x128xf32> to vector<1xf32>
    %29 = vector.shape_cast %28 : vector<1xf32> to vector<1x1x1xf32>
    %30 = vector.extract %29[0, 0, 0] : f32 from vector<1x1x1xf32>
    %31 = arith.divf %30, %10 : f32
    %32 = vector.broadcast %31 : f32 to vector<8x128xf32>
    %33 = arith.mulf %32, %5 : vector<8x128xf32>
    %34 = arith.addf %25, %33 : vector<8x128xf32>
    %c1_i32 = arith.constant 1 : i32
    %cst_12 = arith.constant dense<0.000000e+00> : vector<8x128xf32>
    %35 = tpu.matmul %34, %0, %cst_12 {dimension_numbers = #tpu.dot_dimension_numbers<[1], [1], [0], [0], [0, 0, 1, 0], [], []>} : vector<8x128xf32>, vector<128x128xf32>, vector<8x128xf32> -> vector<8x128xf32>
    %36 = arith.mulf %35, %35 : vector<8x128xf32>
    %37 = vector.shape_cast %36 : vector<8x128xf32> to vector<1x8x128xf32>
    %cst_13 = arith.constant dense<0.000000e+00> : vector<1xf32>
    %38 = vector.multi_reduction <add>, %37, %cst_13 [1, 2] : vector<1x8x128xf32> to vector<1xf32>
    %39 = vector.shape_cast %38 : vector<1xf32> to vector<1x1x1xf32>
    %40 = vector.extract %39[0, 0, 0] : f32 from vector<1x1x1xf32>
    %41 = arith.divf %30, %40 : f32
    %cst_14 = arith.constant 1.000000e+00 : f32
    %42 = arith.mulf %41, %cst_14 : f32
    %43 = vector.broadcast %42 : f32 to vector<8x128xf32>
    %44 = arith.mulf %43, %34 : vector<8x128xf32>
    %45 = arith.addf %21, %44 : vector<8x128xf32>
    %46 = vector.broadcast %42 : f32 to vector<8x128xf32>
    %47 = arith.mulf %46, %35 : vector<8x128xf32>
    %48 = arith.subf %24, %47 : vector<8x128xf32>
    %cst_15 = arith.constant dense<0.000000e+00> : vector<8x128xf32>
    %49 = tpu.matmul %48, %0, %cst_15 {dimension_numbers = #tpu.dot_dimension_numbers<[1], [0], [0], [1], [0, 0, 1, 1], [], []>} : vector<8x128xf32>, vector<128x128xf32>, vector<8x128xf32> -> vector<8x128xf32>
    %50 = arith.mulf %49, %49 : vector<8x128xf32>
    %51 = vector.shape_cast %50 : vector<8x128xf32> to vector<1x8x128xf32>
    %cst_16 = arith.constant dense<0.000000e+00> : vector<1xf32>
    %52 = vector.multi_reduction <add>, %51, %cst_16 [1, 2] : vector<1x8x128xf32> to vector<1xf32>
    %53 = vector.shape_cast %52 : vector<1xf32> to vector<1x1x1xf32>
    %54 = vector.extract %53[0, 0, 0] : f32 from vector<1x1x1xf32>
    %55 = arith.divf %54, %30 : f32
    %56 = vector.broadcast %55 : f32 to vector<8x128xf32>
    %57 = arith.mulf %56, %34 : vector<8x128xf32>
    %58 = arith.addf %49, %57 : vector<8x128xf32>
    %c2_i32 = arith.constant 2 : i32
    %cst_17 = arith.constant dense<0.000000e+00> : vector<8x128xf32>
    %59 = tpu.matmul %58, %0, %cst_17 {dimension_numbers = #tpu.dot_dimension_numbers<[1], [1], [0], [0], [0, 0, 1, 0], [], []>} : vector<8x128xf32>, vector<128x128xf32>, vector<8x128xf32> -> vector<8x128xf32>
    %60 = arith.mulf %59, %59 : vector<8x128xf32>
    %61 = vector.shape_cast %60 : vector<8x128xf32> to vector<1x8x128xf32>
    %cst_18 = arith.constant dense<0.000000e+00> : vector<1xf32>
    %62 = vector.multi_reduction <add>, %61, %cst_18 [1, 2] : vector<1x8x128xf32> to vector<1xf32>
    %63 = vector.shape_cast %62 : vector<1xf32> to vector<1x1x1xf32>
    %64 = vector.extract %63[0, 0, 0] : f32 from vector<1x1x1xf32>
    %65 = arith.divf %54, %64 : f32
    %cst_19 = arith.constant 1.000000e+00 : f32
    %66 = arith.mulf %65, %cst_19 : f32
    %67 = vector.broadcast %66 : f32 to vector<8x128xf32>
    %68 = arith.mulf %67, %58 : vector<8x128xf32>
    %69 = arith.addf %45, %68 : vector<8x128xf32>
    %70 = vector.broadcast %66 : f32 to vector<8x128xf32>
    %71 = arith.mulf %70, %59 : vector<8x128xf32>
    %72 = arith.subf %48, %71 : vector<8x128xf32>
    %cst_20 = arith.constant dense<0.000000e+00> : vector<8x128xf32>
    %73 = tpu.matmul %72, %0, %cst_20 {dimension_numbers = #tpu.dot_dimension_numbers<[1], [0], [0], [1], [0, 0, 1, 1], [], []>} : vector<8x128xf32>, vector<128x128xf32>, vector<8x128xf32> -> vector<8x128xf32>
    %74 = arith.mulf %73, %73 : vector<8x128xf32>
    %75 = vector.shape_cast %74 : vector<8x128xf32> to vector<1x8x128xf32>
    %cst_21 = arith.constant dense<0.000000e+00> : vector<1xf32>
    %76 = vector.multi_reduction <add>, %75, %cst_21 [1, 2] : vector<1x8x128xf32> to vector<1xf32>
    %77 = vector.shape_cast %76 : vector<1xf32> to vector<1x1x1xf32>
    %78 = vector.extract %77[0, 0, 0] : f32 from vector<1x1x1xf32>
    %79 = arith.divf %78, %54 : f32
    %80 = vector.broadcast %79 : f32 to vector<8x128xf32>
    %81 = arith.mulf %80, %58 : vector<8x128xf32>
    %82 = arith.addf %73, %81 : vector<8x128xf32>
    %c3_i32 = arith.constant 3 : i32
    %cst_22 = arith.constant dense<0.000000e+00> : vector<8x128xf32>
    %83 = tpu.matmul %82, %0, %cst_22 {dimension_numbers = #tpu.dot_dimension_numbers<[1], [1], [0], [0], [0, 0, 1, 0], [], []>} : vector<8x128xf32>, vector<128x128xf32>, vector<8x128xf32> -> vector<8x128xf32>
    %84 = arith.mulf %83, %83 : vector<8x128xf32>
    %85 = vector.shape_cast %84 : vector<8x128xf32> to vector<1x8x128xf32>
    %cst_23 = arith.constant dense<0.000000e+00> : vector<1xf32>
    %86 = vector.multi_reduction <add>, %85, %cst_23 [1, 2] : vector<1x8x128xf32> to vector<1xf32>
    %87 = vector.shape_cast %86 : vector<1xf32> to vector<1x1x1xf32>
    %88 = vector.extract %87[0, 0, 0] : f32 from vector<1x1x1xf32>
    %89 = arith.divf %78, %88 : f32
    %cst_24 = arith.constant 1.000000e+00 : f32
    %90 = arith.mulf %89, %cst_24 : f32
    %91 = vector.broadcast %90 : f32 to vector<8x128xf32>
    %92 = arith.mulf %91, %82 : vector<8x128xf32>
    %93 = arith.addf %69, %92 : vector<8x128xf32>
    %94 = vector.broadcast %90 : f32 to vector<8x128xf32>
    %95 = arith.mulf %94, %83 : vector<8x128xf32>
    %96 = arith.subf %72, %95 : vector<8x128xf32>
    %cst_25 = arith.constant dense<0.000000e+00> : vector<8x128xf32>
    %97 = tpu.matmul %96, %0, %cst_25 {dimension_numbers = #tpu.dot_dimension_numbers<[1], [0], [0], [1], [0, 0, 1, 1], [], []>} : vector<8x128xf32>, vector<128x128xf32>, vector<8x128xf32> -> vector<8x128xf32>
    %98 = arith.mulf %97, %97 : vector<8x128xf32>
    %99 = vector.shape_cast %98 : vector<8x128xf32> to vector<1x8x128xf32>
    %cst_26 = arith.constant dense<0.000000e+00> : vector<1xf32>
    %100 = vector.multi_reduction <add>, %99, %cst_26 [1, 2] : vector<1x8x128xf32> to vector<1xf32>
    %101 = vector.shape_cast %100 : vector<1xf32> to vector<1x1x1xf32>
    %102 = vector.extract %101[0, 0, 0] : f32 from vector<1x1x1xf32>
    %103 = arith.divf %102, %78 : f32
    %104 = vector.broadcast %103 : f32 to vector<8x128xf32>
    %105 = arith.mulf %104, %82 : vector<8x128xf32>
    %106 = arith.addf %97, %105 : vector<8x128xf32>
    %c4_i32 = arith.constant 4 : i32
    %cst_27 = arith.constant dense<0.000000e+00> : vector<8x128xf32>
    %107 = tpu.matmul %106, %0, %cst_27 {dimension_numbers = #tpu.dot_dimension_numbers<[1], [1], [0], [0], [0, 0, 1, 0], [], []>} : vector<8x128xf32>, vector<128x128xf32>, vector<8x128xf32> -> vector<8x128xf32>
    %108 = arith.mulf %107, %107 : vector<8x128xf32>
    %109 = vector.shape_cast %108 : vector<8x128xf32> to vector<1x8x128xf32>
    %cst_28 = arith.constant dense<0.000000e+00> : vector<1xf32>
    %110 = vector.multi_reduction <add>, %109, %cst_28 [1, 2] : vector<1x8x128xf32> to vector<1xf32>
    %111 = vector.shape_cast %110 : vector<1xf32> to vector<1x1x1xf32>
    %112 = vector.extract %111[0, 0, 0] : f32 from vector<1x1x1xf32>
    %113 = arith.divf %102, %112 : f32
    %cst_29 = arith.constant 1.000000e+00 : f32
    %114 = arith.mulf %113, %cst_29 : f32
    %115 = vector.broadcast %114 : f32 to vector<8x128xf32>
    %116 = arith.mulf %115, %106 : vector<8x128xf32>
    %117 = arith.addf %93, %116 : vector<8x128xf32>
    %118 = vector.broadcast %114 : f32 to vector<8x128xf32>
    %119 = arith.mulf %118, %107 : vector<8x128xf32>
    %120 = arith.subf %96, %119 : vector<8x128xf32>
    %cst_30 = arith.constant dense<0.000000e+00> : vector<8x128xf32>
    %121 = tpu.matmul %120, %0, %cst_30 {dimension_numbers = #tpu.dot_dimension_numbers<[1], [0], [0], [1], [0, 0, 1, 1], [], []>} : vector<8x128xf32>, vector<128x128xf32>, vector<8x128xf32> -> vector<8x128xf32>
    %122 = arith.mulf %121, %121 : vector<8x128xf32>
    %123 = vector.shape_cast %122 : vector<8x128xf32> to vector<1x8x128xf32>
    %cst_31 = arith.constant dense<0.000000e+00> : vector<1xf32>
    %124 = vector.multi_reduction <add>, %123, %cst_31 [1, 2] : vector<1x8x128xf32> to vector<1xf32>
    %125 = vector.shape_cast %124 : vector<1xf32> to vector<1x1x1xf32>
    %126 = vector.extract %125[0, 0, 0] : f32 from vector<1x1x1xf32>
    %127 = arith.divf %126, %102 : f32
    %128 = vector.broadcast %127 : f32 to vector<8x128xf32>
    %129 = arith.mulf %128, %106 : vector<8x128xf32>
    %130 = arith.addf %121, %129 : vector<8x128xf32>
    %c5_i32 = arith.constant 5 : i32
    %cst_32 = arith.constant dense<0.000000e+00> : vector<8x128xf32>
    %131 = tpu.matmul %130, %0, %cst_32 {dimension_numbers = #tpu.dot_dimension_numbers<[1], [1], [0], [0], [0, 0, 1, 0], [], []>} : vector<8x128xf32>, vector<128x128xf32>, vector<8x128xf32> -> vector<8x128xf32>
    %132 = arith.mulf %131, %131 : vector<8x128xf32>
    %133 = vector.shape_cast %132 : vector<8x128xf32> to vector<1x8x128xf32>
    %cst_33 = arith.constant dense<0.000000e+00> : vector<1xf32>
    %134 = vector.multi_reduction <add>, %133, %cst_33 [1, 2] : vector<1x8x128xf32> to vector<1xf32>
    %135 = vector.shape_cast %134 : vector<1xf32> to vector<1x1x1xf32>
    %136 = vector.extract %135[0, 0, 0] : f32 from vector<1x1x1xf32>
    %137 = arith.divf %126, %136 : f32
    %cst_34 = arith.constant 1.000000e+00 : f32
    %138 = arith.mulf %137, %cst_34 : f32
    %139 = vector.broadcast %138 : f32 to vector<8x128xf32>
    %140 = arith.mulf %139, %130 : vector<8x128xf32>
    %141 = arith.addf %117, %140 : vector<8x128xf32>
    %142 = vector.broadcast %138 : f32 to vector<8x128xf32>
    %143 = arith.mulf %142, %131 : vector<8x128xf32>
    %144 = arith.subf %120, %143 : vector<8x128xf32>
    %cst_35 = arith.constant dense<0.000000e+00> : vector<8x128xf32>
    %145 = tpu.matmul %144, %0, %cst_35 {dimension_numbers = #tpu.dot_dimension_numbers<[1], [0], [0], [1], [0, 0, 1, 1], [], []>} : vector<8x128xf32>, vector<128x128xf32>, vector<8x128xf32> -> vector<8x128xf32>
    %146 = arith.mulf %145, %145 : vector<8x128xf32>
    %147 = vector.shape_cast %146 : vector<8x128xf32> to vector<1x8x128xf32>
    %cst_36 = arith.constant dense<0.000000e+00> : vector<1xf32>
    %148 = vector.multi_reduction <add>, %147, %cst_36 [1, 2] : vector<1x8x128xf32> to vector<1xf32>
    %149 = vector.shape_cast %148 : vector<1xf32> to vector<1x1x1xf32>
    %150 = vector.extract %149[0, 0, 0] : f32 from vector<1x1x1xf32>
    %151 = arith.divf %150, %126 : f32
    %152 = vector.broadcast %151 : f32 to vector<8x128xf32>
    %153 = arith.mulf %152, %130 : vector<8x128xf32>
    %154 = arith.addf %145, %153 : vector<8x128xf32>
    %c6_i32 = arith.constant 6 : i32
    %cst_37 = arith.constant dense<0.000000e+00> : vector<8x128xf32>
    %155 = tpu.matmul %154, %0, %cst_37 {dimension_numbers = #tpu.dot_dimension_numbers<[1], [1], [0], [0], [0, 0, 1, 0], [], []>} : vector<8x128xf32>, vector<128x128xf32>, vector<8x128xf32> -> vector<8x128xf32>
    %156 = arith.mulf %155, %155 : vector<8x128xf32>
    %157 = vector.shape_cast %156 : vector<8x128xf32> to vector<1x8x128xf32>
    %cst_38 = arith.constant dense<0.000000e+00> : vector<1xf32>
    %158 = vector.multi_reduction <add>, %157, %cst_38 [1, 2] : vector<1x8x128xf32> to vector<1xf32>
    %159 = vector.shape_cast %158 : vector<1xf32> to vector<1x1x1xf32>
    %160 = vector.extract %159[0, 0, 0] : f32 from vector<1x1x1xf32>
    %161 = arith.divf %150, %160 : f32
    %cst_39 = arith.constant 1.000000e+00 : f32
    %162 = arith.mulf %161, %cst_39 : f32
    %163 = vector.broadcast %162 : f32 to vector<8x128xf32>
    %164 = arith.mulf %163, %154 : vector<8x128xf32>
    %165 = arith.addf %141, %164 : vector<8x128xf32>
    %166 = vector.broadcast %162 : f32 to vector<8x128xf32>
    %167 = arith.mulf %166, %155 : vector<8x128xf32>
    %168 = arith.subf %144, %167 : vector<8x128xf32>
    %cst_40 = arith.constant dense<0.000000e+00> : vector<8x128xf32>
    %169 = tpu.matmul %168, %0, %cst_40 {dimension_numbers = #tpu.dot_dimension_numbers<[1], [0], [0], [1], [0, 0, 1, 1], [], []>} : vector<8x128xf32>, vector<128x128xf32>, vector<8x128xf32> -> vector<8x128xf32>
    %170 = arith.mulf %169, %169 : vector<8x128xf32>
    %171 = vector.shape_cast %170 : vector<8x128xf32> to vector<1x8x128xf32>
    %cst_41 = arith.constant dense<0.000000e+00> : vector<1xf32>
    %172 = vector.multi_reduction <add>, %171, %cst_41 [1, 2] : vector<1x8x128xf32> to vector<1xf32>
    %173 = vector.shape_cast %172 : vector<1xf32> to vector<1x1x1xf32>
    %174 = vector.extract %173[0, 0, 0] : f32 from vector<1x1x1xf32>
    %175 = arith.divf %174, %150 : f32
    %176 = vector.broadcast %175 : f32 to vector<8x128xf32>
    %177 = arith.mulf %176, %154 : vector<8x128xf32>
    %178 = arith.addf %169, %177 : vector<8x128xf32>
    %c7_i32 = arith.constant 7 : i32
    %cst_42 = arith.constant dense<0.000000e+00> : vector<8x128xf32>
    %179 = tpu.matmul %178, %0, %cst_42 {dimension_numbers = #tpu.dot_dimension_numbers<[1], [1], [0], [0], [0, 0, 1, 0], [], []>} : vector<8x128xf32>, vector<128x128xf32>, vector<8x128xf32> -> vector<8x128xf32>
    %180 = arith.mulf %179, %179 : vector<8x128xf32>
    %181 = vector.shape_cast %180 : vector<8x128xf32> to vector<1x8x128xf32>
    %cst_43 = arith.constant dense<0.000000e+00> : vector<1xf32>
    %182 = vector.multi_reduction <add>, %181, %cst_43 [1, 2] : vector<1x8x128xf32> to vector<1xf32>
    %183 = vector.shape_cast %182 : vector<1xf32> to vector<1x1x1xf32>
    %184 = vector.extract %183[0, 0, 0] : f32 from vector<1x1x1xf32>
    %185 = arith.divf %174, %184 : f32
    %cst_44 = arith.constant 1.000000e+00 : f32
    %186 = arith.mulf %185, %cst_44 : f32
    %187 = vector.broadcast %186 : f32 to vector<8x128xf32>
    %188 = arith.mulf %187, %178 : vector<8x128xf32>
    %189 = arith.addf %165, %188 : vector<8x128xf32>
    %190 = vector.broadcast %186 : f32 to vector<8x128xf32>
    %191 = arith.mulf %190, %179 : vector<8x128xf32>
    %192 = arith.subf %168, %191 : vector<8x128xf32>
    %cst_45 = arith.constant dense<0.000000e+00> : vector<8x128xf32>
    %193 = tpu.matmul %192, %0, %cst_45 {dimension_numbers = #tpu.dot_dimension_numbers<[1], [0], [0], [1], [0, 0, 1, 1], [], []>} : vector<8x128xf32>, vector<128x128xf32>, vector<8x128xf32> -> vector<8x128xf32>
    %194 = arith.mulf %193, %193 : vector<8x128xf32>
    %195 = vector.shape_cast %194 : vector<8x128xf32> to vector<1x8x128xf32>
    %cst_46 = arith.constant dense<0.000000e+00> : vector<1xf32>
    %196 = vector.multi_reduction <add>, %195, %cst_46 [1, 2] : vector<1x8x128xf32> to vector<1xf32>
    %197 = vector.shape_cast %196 : vector<1xf32> to vector<1x1x1xf32>
    %198 = vector.extract %197[0, 0, 0] : f32 from vector<1x1x1xf32>
    %199 = arith.divf %198, %174 : f32
    %200 = vector.broadcast %199 : f32 to vector<8x128xf32>
    %201 = arith.mulf %200, %178 : vector<8x128xf32>
    %202 = arith.addf %193, %201 : vector<8x128xf32>
    %c8_i32 = arith.constant 8 : i32
    %cst_47 = arith.constant dense<0.000000e+00> : vector<8x128xf32>
    %203 = tpu.matmul %202, %0, %cst_47 {dimension_numbers = #tpu.dot_dimension_numbers<[1], [1], [0], [0], [0, 0, 1, 0], [], []>} : vector<8x128xf32>, vector<128x128xf32>, vector<8x128xf32> -> vector<8x128xf32>
    %204 = arith.mulf %203, %203 : vector<8x128xf32>
    %205 = vector.shape_cast %204 : vector<8x128xf32> to vector<1x8x128xf32>
    %cst_48 = arith.constant dense<0.000000e+00> : vector<1xf32>
    %206 = vector.multi_reduction <add>, %205, %cst_48 [1, 2] : vector<1x8x128xf32> to vector<1xf32>
    %207 = vector.shape_cast %206 : vector<1xf32> to vector<1x1x1xf32>
    %208 = vector.extract %207[0, 0, 0] : f32 from vector<1x1x1xf32>
    %209 = arith.divf %198, %208 : f32
    %cst_49 = arith.constant 1.000000e+00 : f32
    %210 = arith.mulf %209, %cst_49 : f32
    %211 = vector.broadcast %210 : f32 to vector<8x128xf32>
    %212 = arith.mulf %211, %202 : vector<8x128xf32>
    %213 = arith.addf %189, %212 : vector<8x128xf32>
    %214 = vector.broadcast %210 : f32 to vector<8x128xf32>
    %215 = arith.mulf %214, %203 : vector<8x128xf32>
    %216 = arith.subf %192, %215 : vector<8x128xf32>
    %cst_50 = arith.constant dense<0.000000e+00> : vector<8x128xf32>
    %217 = tpu.matmul %216, %0, %cst_50 {dimension_numbers = #tpu.dot_dimension_numbers<[1], [0], [0], [1], [0, 0, 1, 1], [], []>} : vector<8x128xf32>, vector<128x128xf32>, vector<8x128xf32> -> vector<8x128xf32>
    %218 = arith.mulf %217, %217 : vector<8x128xf32>
    %219 = vector.shape_cast %218 : vector<8x128xf32> to vector<1x8x128xf32>
    %cst_51 = arith.constant dense<0.000000e+00> : vector<1xf32>
    %220 = vector.multi_reduction <add>, %219, %cst_51 [1, 2] : vector<1x8x128xf32> to vector<1xf32>
    %221 = vector.shape_cast %220 : vector<1xf32> to vector<1x1x1xf32>
    %222 = vector.extract %221[0, 0, 0] : f32 from vector<1x1x1xf32>
    %223 = arith.divf %222, %198 : f32
    %224 = vector.broadcast %223 : f32 to vector<8x128xf32>
    %225 = arith.mulf %224, %202 : vector<8x128xf32>
    %226 = arith.addf %217, %225 : vector<8x128xf32>
    %c9_i32 = arith.constant 9 : i32
    %cst_52 = arith.constant dense<0.000000e+00> : vector<8x128xf32>
    %227 = tpu.matmul %226, %0, %cst_52 {dimension_numbers = #tpu.dot_dimension_numbers<[1], [1], [0], [0], [0, 0, 1, 0], [], []>} : vector<8x128xf32>, vector<128x128xf32>, vector<8x128xf32> -> vector<8x128xf32>
    %228 = arith.mulf %227, %227 : vector<8x128xf32>
    %229 = vector.shape_cast %228 : vector<8x128xf32> to vector<1x8x128xf32>
    %cst_53 = arith.constant dense<0.000000e+00> : vector<1xf32>
    %230 = vector.multi_reduction <add>, %229, %cst_53 [1, 2] : vector<1x8x128xf32> to vector<1xf32>
    %231 = vector.shape_cast %230 : vector<1xf32> to vector<1x1x1xf32>
    %232 = vector.extract %231[0, 0, 0] : f32 from vector<1x1x1xf32>
    %233 = arith.divf %222, %232 : f32
    %cst_54 = arith.constant 1.000000e+00 : f32
    %234 = arith.mulf %233, %cst_54 : f32
    %235 = vector.broadcast %234 : f32 to vector<8x128xf32>
    %236 = arith.mulf %235, %226 : vector<8x128xf32>
    %237 = arith.addf %213, %236 : vector<8x128xf32>
    %238 = vector.broadcast %234 : f32 to vector<8x128xf32>
    %239 = arith.mulf %238, %227 : vector<8x128xf32>
    %240 = arith.subf %216, %239 : vector<8x128xf32>
    %cst_55 = arith.constant dense<0.000000e+00> : vector<8x128xf32>
    %241 = tpu.matmul %240, %0, %cst_55 {dimension_numbers = #tpu.dot_dimension_numbers<[1], [0], [0], [1], [0, 0, 1, 1], [], []>} : vector<8x128xf32>, vector<128x128xf32>, vector<8x128xf32> -> vector<8x128xf32>
    %242 = arith.mulf %241, %241 : vector<8x128xf32>
    %243 = vector.shape_cast %242 : vector<8x128xf32> to vector<1x8x128xf32>
    %cst_56 = arith.constant dense<0.000000e+00> : vector<1xf32>
    %244 = vector.multi_reduction <add>, %243, %cst_56 [1, 2] : vector<1x8x128xf32> to vector<1xf32>
    %245 = vector.shape_cast %244 : vector<1xf32> to vector<1x1x1xf32>
    %246 = vector.extract %245[0, 0, 0] : f32 from vector<1x1x1xf32>
    %247 = arith.divf %246, %222 : f32
    %248 = vector.broadcast %247 : f32 to vector<8x128xf32>
    %249 = arith.mulf %248, %226 : vector<8x128xf32>
    %250 = arith.addf %241, %249 : vector<8x128xf32>
    %c0_57 = arith.constant 0 : index
    %c0_58 = arith.constant 0 : index
    %251 = vector.load %arg3[%c0_57, %c0_58] : memref<8x128xf32, #tpu.memory_space<vmem>>, vector<8x128xf32>
    tpu.vector_store %arg3[%c0_57, %c0_58], %237 {strides = array<i32>} : memref<8x128xf32, #tpu.memory_space<vmem>>, vector<8x128xf32>,
    return
  }
}

</mosaic_0001>

<llo_original>
// kernel: tpu_custom_call.1
$region0: #{tpu_custom_call.1}
  #allocation0 [shape = 'u32[]', space=smem, size = 0x4, offset = 0x4, fixed_abs, tag = 'smem constant byte address 0x4 - core index']
  #allocation1 [shape = 'u32[144,128]{1,0:T(1,128)}', space=vmem, size = 0x12000, scoped, tag = 'internal scratch']
  %s0 = inlined_call_operand.hbm [shape: f32[8,128], index: 0, kind: input, shape index: {}]
  %s1 = inlined_call_operand.hbm [shape: f32[8,128], index: 1, kind: input, shape index: {}]
  %s2 = inlined_call_operand.hbm [shape: f32[128,128], index: 2, kind: input, shape index: {}]
  %s3 = inlined_call_operand.hbm [shape: f32[8,128], index: 3, kind: output, shape index: {}]
  %s4 = sld [smem:[#allocation0]]
  $region34: #{tpu_custom_call.1} parent=0
    _
  %s6 = ssub.s32 1, %s4
  %s7 = scalar_select 0, %s6, %s4
  $region1: #{tpu_custom_call.1} parent=0
    #allocation2 [shape = 'u8[4096]{0}', space=vmem, size = 0x1000, scoped, tag = 'input window, operand 0, single buffered']
    #allocation3 [shape = 's32[1]{0}', space=sflag, size = 0x4, scoped, tag = 'scoped memory for tpu_custom_call.1']
    #allocation4 [shape = 's32[1]{0}', space=sflag, size = 0x4, scoped, tag = 'scoped memory for tpu_custom_call.1']
    #allocation5 [shape = 'u8[4096]{0}', space=vmem, size = 0x1000, scoped, tag = 'input window, operand 1, single buffered']
    #allocation6 [shape = 's32[1]{0}', space=sflag, size = 0x4, scoped, tag = 'scoped memory for tpu_custom_call.1']
    #allocation7 [shape = 'u8[65536]{0}', space=vmem, size = 0x10000, scoped, tag = 'input window, operand 2, single buffered']
    #allocation8 [shape = 'u8[4096]{0}', space=vmem, size = 0x1000, scoped, tag = 'output window, operand 0, single buffered']
    %8 = vsyncpa [#allocation3], 0
    %9 = vsyncpa [#allocation6], 0
    %10 = vsyncpa [#allocation4], 0
    // Predicated region
    $region2: #{tpu_custom_call.1} parent=1 // pred_check
      _
    $region3: #{tpu_custom_call.1} parent=1 // pred_check_branch
      %12 = sbr.rel (0) target = $region5
    $region4: #{tpu_custom_call.1} parent=1 // pred_region
      %s14 = ssub.s32 128, 128
      %15 = vsyncadd [#allocation3], %s14
      %s17 = sshll.u32 [#allocation2], 4
      %s18 = int_to_ptr.vmem [resolvable:$true] %s17
      %20 = dma.hbm_to_vmem [thread:$0]  %s0, 128, %s18, [#allocation3]
    $region5: #{tpu_custom_call.1} parent=1 // pred_fallthru
      _
    // Predicated region
    $region6: #{tpu_custom_call.1} parent=1 // pred_check
      _
    $region7: #{tpu_custom_call.1} parent=1 // pred_check_branch
      %22 = sbr.rel (0) target = $region9
    $region8: #{tpu_custom_call.1} parent=1 // pred_region
      %s24 = ssub.s32 128, 128
      %25 = vsyncadd [#allocation6], %s24
      %s27 = sshll.u32 [#allocation5], 4
      %s28 = int_to_ptr.vmem [resolvable:$true] %s27
      %30 = dma.hbm_to_vmem [thread:$0]  %s1, 128, %s28, [#allocation6]
    $region9: #{tpu_custom_call.1} parent=1 // pred_fallthru
      _
    // Predicated region
    $region10: #{tpu_custom_call.1} parent=1 // pred_check
      _
    $region11: #{tpu_custom_call.1} parent=1 // pred_check_branch
      %32 = sbr.rel (0) target = $region13
    $region12: #{tpu_custom_call.1} parent=1 // pred_region
      %s34 = ssub.s32 2048, 2048
      %35 = vsyncadd [#allocation6], %s34
      %s36 = sshll.u32 [#allocation7], 4
      %s37 = int_to_ptr.vmem [resolvable:$true] %s36
      %42 = dma.hbm_to_vmem [thread:$0]  %s2, 2048, %s37, [#allocation6], 128, 128, 8
    $region13: #{tpu_custom_call.1} parent=1 // pred_fallthru
      _
    // Predicated region
    $region14: #{tpu_custom_call.1} parent=1 // pred_check
      _
    $region15: #{tpu_custom_call.1} parent=1 // pred_check_branch
      %44 = sbr.rel (0) target = $region17
    $region16: #{tpu_custom_call.1} parent=1 // pred_region
      %45 = dma.done [#allocation3], 128
    $region17: #{tpu_custom_call.1} parent=1 // pred_fallthru
      _
    // Predicated region
    $region18: #{tpu_custom_call.1} parent=1 // pred_check
      _
    $region19: #{tpu_custom_call.1} parent=1 // pred_check_branch
      %47 = sbr.rel (0) target = $region21
    $region20: #{tpu_custom_call.1} parent=1 // pred_region
      %48 = dma.done [#allocation6], 128
    $region21: #{tpu_custom_call.1} parent=1 // pred_fallthru
      _
    // Predicated region
    $region22: #{tpu_custom_call.1} parent=1 // pred_check
      _
    $region23: #{tpu_custom_call.1} parent=1 // pred_check_branch
      %50 = sbr.rel (0) target = $region25
    $region24: #{tpu_custom_call.1} parent=1 // pred_region
      %51 = dma.done [#allocation6], 2048
    $region25: #{tpu_custom_call.1} parent=1 // pred_fallthru
      _
    %v52 = vld [vmem:[#allocation7] sm:$0xff]
    %v53 = vld [vmem:[#allocation7 + $0x8] sm:$0xff]
    %v54 = vld [vmem:[#allocation7 + $0x10] sm:$0xff]
    %v55 = vld [vmem:[#allocation7 + $0x18] sm:$0xff]
    %v56 = vld [vmem:[#allocation7 + $0x20] sm:$0xff]
    %v57 = vld [vmem:[#allocation7 + $0x28] sm:$0xff]
    %v58 = vld [vmem:[#allocation7 + $0x30] sm:$0xff]
    %v59 = vld [vmem:[#allocation7 + $0x38] sm:$0xff]
    %v60 = vld [vmem:[#allocation7 + $0x40] sm:$0xff]
    %v61 = vld [vmem:[#allocation7 + $0x48] sm:$0xff]
    %v62 = vld [vmem:[#allocation7 + $0x50] sm:$0xff]
    %v63 = vld [vmem:[#allocation7 + $0x58] sm:$0xff]
    %v64 = vld [vmem:[#allocation7 + $0x60] sm:$0xff]
    %v65 = vld [vmem:[#allocation7 + $0x68] sm:$0xff]
    %v66 = vld [vmem:[#allocation7 + $0x70] sm:$0xff]
    %v67 = vld [vmem:[#allocation7 + $0x78] sm:$0xff]
    %v68 = vld [vmem:[#allocation2] sm:$0xff]
    %v69 = vld [vmem:[#allocation5] sm:$0xff]
    %70 = vmatprep.subr.mxu0 0.0
    %71 = vmatpush1.xpose.msra.mxu0 %v52
    %72 = vmatprep.subr.mxu0 0.0
    %73 = vmatpush1.xpose.msra.mxu0 %v53
    %74 = vmatprep.subr.mxu0 0.0
    %75 = vmatpush1.xpose.msra.mxu0 %v54
    %76 = vmatprep.subr.mxu0 0.0
    %77 = vmatpush1.xpose.msra.mxu0 %v55
    %78 = vmatprep.subr.mxu0 0.0
    %79 = vmatpush1.xpose.msra.mxu0 %v56
    %80 = vmatprep.subr.mxu0 0.0
    %81 = vmatpush1.xpose.msra.mxu0 %v57
    %82 = vmatprep.subr.mxu0 0.0
    %83 = vmatpush1.xpose.msra.mxu0 %v58
    %84 = vmatprep.subr.mxu0 0.0
    %85 = vmatpush1.xpose.msra.mxu0 %v59
    %86 = vmatprep.subr.mxu0 0.0
    %87 = vmatpush1.xpose.msra.mxu0 %v60
    %88 = vmatprep.subr.mxu0 0.0
    %89 = vmatpush1.xpose.msra.mxu0 %v61
    %90 = vmatprep.subr.mxu0 0.0
    %91 = vmatpush1.xpose.msra.mxu0 %v62
    %92 = vmatprep.subr.mxu0 0.0
    %93 = vmatpush1.xpose.msra.mxu0 %v63
    %94 = vmatprep.subr.mxu0 0.0
    %95 = vmatpush1.xpose.msra.mxu0 %v64
    %96 = vmatprep.subr.mxu0 0.0
    %97 = vmatpush1.xpose.msra.mxu0 %v65
    %98 = vmatprep.subr.mxu0 0.0
    %99 = vmatpush1.xpose.msra.mxu0 %v66
    %100 = vmatprep.subr.mxu0 0.0
    %101 = vmatpush1.xpose.msra.mxu0 %v67
    %102 = vmatprep.subr.mxu0 0.0
    %103 = vmatpush1.xpose.msra.mxu0 0.0
    %104 = vmatprep.subr.mxu0 0.0
    %105 = vmatpush1.xpose.msra.mxu0 0.0
    %106 = vmatprep.subr.mxu0 0.0
    %107 = vmatpush1.xpose.msra.mxu0 0.0
    %108 = vmatprep.subr.mxu0 0.0
    %109 = vmatpush1.xpose.msra.mxu0 0.0
    %110 = vmatprep.subr.mxu0 0.0
    %111 = vmatpush1.xpose.msra.mxu0 0.0
    %112 = vmatprep.subr.mxu0 0.0
    %113 = vmatpush1.xpose.msra.mxu0 0.0
    %114 = vmatprep.subr.mxu0 0.0
    %115 = vmatpush1.xpose.msra.mxu0 0.0
    %116 = vmatprep.subr.mxu0 0.0
    %117 = vmatpush1.xpose.msra.mxu0 0.0
    %118 = vmatprep.subr.mxu0 0.0
    %119 = vmatpush1.xpose.msra.mxu0 0.0
    %120 = vmatprep.subr.mxu0 0.0
    %121 = vmatpush1.xpose.msra.mxu0 0.0
    %122 = vmatprep.subr.mxu0 0.0
    %123 = vmatpush1.xpose.msra.mxu0 0.0
    %124 = vmatprep.subr.mxu0 0.0
    %125 = vmatpush1.xpose.msra.mxu0 0.0
    %126 = vmatprep.subr.mxu0 0.0
    %127 = vmatpush1.xpose.msra.mxu0 0.0
    %128 = vmatprep.subr.mxu0 0.0
    %129 = vmatpush1.xpose.msra.mxu0 0.0
    %130 = vmatprep.subr.mxu0 0.0
    %131 = vmatpush1.xpose.msra.mxu0 0.0
    %132 = vmatprep.subr.mxu0 0.0
    %133 = vmatpush1.xpose.msra.mxu0 0.0
    %134 = vmatprep.mubr.f32.mxu0 0.0
    %135 = vmatmul.mubr.f32.gmra.mrb[0].mxu0 %v68
    %v136 = vpop.f32.mrb[0].mxu0
    %v137 = vadd.f32 0.0, %v136
    %v138 = vpop.f32.mrb[0].mxu0
    %139 = vdwg.mxu0
    %v140 = vsub.f32 %v69, %v137
    %141 = vmatprep.subr.mxu0 0.0
    %142 = vmatpush1.msra.mxu0 %v52
    %143 = vmatprep.subr.mxu0 0.0
    %144 = vmatpush1.msra.mxu0 %v53
    %145 = vmatprep.subr.mxu0 0.0
    %146 = vmatpush1.msra.mxu0 %v54
    %147 = vmatprep.subr.mxu0 0.0
    %148 = vmatpush1.msra.mxu0 %v55
    %149 = vmatprep.subr.mxu0 0.0
    %150 = vmatpush1.msra.mxu0 %v56
    %151 = vmatprep.subr.mxu0 0.0
    %152 = vmatpush1.msra.mxu0 %v57
    %153 = vmatprep.subr.mxu0 0.0
    %154 = vmatpush1.msra.mxu0 %v58
    %155 = vmatprep.subr.mxu0 0.0
    %156 = vmatpush1.msra.mxu0 %v59
    %157 = vmatprep.subr.mxu0 0.0
    %158 = vmatpush1.msra.mxu0 %v60
    %159 = vmatprep.subr.mxu0 0.0
    %160 = vmatpush1.msra.mxu0 %v61
    %161 = vmatprep.subr.mxu0 0.0
    %162 = vmatpush1.msra.mxu0 %v62
    %163 = vmatprep.subr.mxu0 0.0
    %164 = vmatpush1.msra.mxu0 %v63
    %165 = vmatprep.subr.mxu0 0.0
    %166 = vmatpush1.msra.mxu0 %v64
    %167 = vmatprep.subr.mxu0 0.0
    %168 = vmatpush1.msra.mxu0 %v65
    %169 = vmatprep.subr.mxu0 0.0
    %170 = vmatpush1.msra.mxu0 %v66
    %171 = vmatprep.subr.mxu0 0.0
    %172 = vmatpush1.msra.mxu0 %v67
    %173 = vmatprep.subr.mxu0 0.0
    %174 = vmatpush1.msra.mxu0 0.0
    %175 = vmatprep.subr.mxu0 0.0
    %176 = vmatpush1.msra.mxu0 0.0
    %177 = vmatprep.subr.mxu0 0.0
    %178 = vmatpush1.msra.mxu0 0.0
    %179 = vmatprep.subr.mxu0 0.0
    %180 = vmatpush1.msra.mxu0 0.0
    %181 = vmatprep.subr.mxu0 0.0
    %182 = vmatpush1.msra.mxu0 0.0
    %183 = vmatprep.subr.mxu0 0.0
    %184 = vmatpush1.msra.mxu0 0.0
    %185 = vmatprep.subr.mxu0 0.0
    %186 = vmatpush1.msra.mxu0 0.0
    %187 = vmatprep.subr.mxu0 0.0
    %188 = vmatpush1.msra.mxu0 0.0
    %189 = vmatprep.subr.mxu0 0.0
    %190 = vmatpush1.msra.mxu0 0.0
    %191 = vmatprep.subr.mxu0 0.0
    %192 = vmatpush1.msra.mxu0 0.0
    %193 = vmatprep.subr.mxu0 0.0
    %194 = vmatpush1.msra.mxu0 0.0
    %195 = vmatprep.subr.mxu0 0.0
    %196 = vmatpush1.msra.mxu0 0.0
    %197 = vmatprep.subr.mxu0 0.0
    %198 = vmatpush1.msra.mxu0 0.0
    %199 = vmatprep.subr.mxu0 0.0
    %200 = vmatpush1.msra.mxu0 0.0
    %201 = vmatprep.subr.mxu0 0.0
    %202 = vmatpush1.msra.mxu0 0.0
    %203 = vmatprep.subr.mxu0 0.0
    %204 = vmatpush1.msra.mxu0 0.0
    %205 = vmatprep.mubr.f32.mxu0 0.0
    %206 = vmatmul.mubr.f32.gmra.mrb[0].mxu0 %v140
    %v207 = vpop.f32.mrb[0].mxu0
    %v208 = vadd.f32 0.0, %v207
    %v209 = vpop.f32.mrb[0].mxu0
    %210 = vdwg.mxu0
    %v211 = vmul.f32 %v208, %v208
    %212 = vadd.xlane.f32.xlu0 %v211
    %v213 = vpop.xlane.xlu0 %212
    %v214 = vrot.slane %v213, 4
    %v215 = vadd.f32 %v213, %v214
    %v216 = vrot.slane %v215, 2
    %v217 = vadd.f32 %v215, %v216
    %v218 = vrot.slane %v217, 1
    %v219 = vadd.f32 %v217, %v218
    %s220 = vtos %v219
    %221 = vmatprep.subr.mxu0 0.0
    %222 = vmatpush1.xpose.msra.mxu0 %v52
    %223 = vmatprep.subr.mxu0 0.0
    %224 = vmatpush1.xpose.msra.mxu0 %v53
    %225 = vmatprep.subr.mxu0 0.0
    %226 = vmatpush1.xpose.msra.mxu0 %v54
    %227 = vmatprep.subr.mxu0 0.0
    %228 = vmatpush1.xpose.msra.mxu0 %v55
    %229 = vmatprep.subr.mxu0 0.0
    %230 = vmatpush1.xpose.msra.mxu0 %v56
    %231 = vmatprep.subr.mxu0 0.0
    %232 = vmatpush1.xpose.msra.mxu0 %v57
    %233 = vmatprep.subr.mxu0 0.0
    %234 = vmatpush1.xpose.msra.mxu0 %v58
    %235 = vmatprep.subr.mxu0 0.0
    %236 = vmatpush1.xpose.msra.mxu0 %v59
    %237 = vmatprep.subr.mxu0 0.0
    %238 = vmatpush1.xpose.msra.mxu0 %v60
    %239 = vmatprep.subr.mxu0 0.0
    %240 = vmatpush1.xpose.msra.mxu0 %v61
    %241 = vmatprep.subr.mxu0 0.0
    %242 = vmatpush1.xpose.msra.mxu0 %v62
    %243 = vmatprep.subr.mxu0 0.0
    %244 = vmatpush1.xpose.msra.mxu0 %v63
    %245 = vmatprep.subr.mxu0 0.0
    %246 = vmatpush1.xpose.msra.mxu0 %v64
    %247 = vmatprep.subr.mxu0 0.0
    %248 = vmatpush1.xpose.msra.mxu0 %v65
    %249 = vmatprep.subr.mxu0 0.0
    %250 = vmatpush1.xpose.msra.mxu0 %v66
    %251 = vmatprep.subr.mxu0 0.0
    %252 = vmatpush1.xpose.msra.mxu0 %v67
    %253 = vmatprep.subr.mxu0 0.0
    %254 = vmatpush1.xpose.msra.mxu0 0.0
    %255 = vmatprep.subr.mxu0 0.0
    %256 = vmatpush1.xpose.msra.mxu0 0.0
    %257 = vmatprep.subr.mxu0 0.0
    %258 = vmatpush1.xpose.msra.mxu0 0.0
    %259 = vmatprep.subr.mxu0 0.0
    %260 = vmatpush1.xpose.msra.mxu0 0.0
    %261 = vmatprep.subr.mxu0 0.0
    %262 = vmatpush1.xpose.msra.mxu0 0.0
    %263 = vmatprep.subr.mxu0 0.0
    %264 = vmatpush1.xpose.msra.mxu0 0.0
    %265 = vmatprep.subr.mxu0 0.0
    %266 = vmatpush1.xpose.msra.mxu0 0.0
    %267 = vmatprep.subr.mxu0 0.0
    %268 = vmatpush1.xpose.msra.mxu0 0.0
    %269 = vmatprep.subr.mxu0 0.0
    %270 = vmatpush1.xpose.msra.mxu0 0.0
    %271 = vmatprep.subr.mxu0 0.0
    %272 = vmatpush1.xpose.msra.mxu0 0.0
    %273 = vmatprep.subr.mxu0 0.0
    %274 = vmatpush1.xpose.msra.mxu0 0.0
    %275 = vmatprep.subr.mxu0 0.0
    %276 = vmatpush1.xpose.msra.mxu0 0.0
    %277 = vmatprep.subr.mxu0 0.0
    %278 = vmatpush1.xpose.msra.mxu0 0.0
    %279 = vmatprep.subr.mxu0 0.0
    %280 = vmatpush1.xpose.msra.mxu0 0.0
    %281 = vmatprep.subr.mxu0 0.0
    %282 = vmatpush1.xpose.msra.mxu0 0.0
    %283 = vmatprep.subr.mxu0 0.0
    %284 = vmatpush1.xpose.msra.mxu0 0.0
    %285 = vmatprep.mubr.f32.mxu0 0.0
    %286 = vmatmul.mubr.f32.gmra.mrb[0].mxu0 %v208
    %v287 = vpop.f32.mrb[0].mxu0
    %v288 = vadd.f32 0.0, %v287
    %v289 = vpop.f32.mrb[0].mxu0
    %290 = vdwg.mxu0
    %v291 = vmul.f32 %v288, %v288
    %292 = vadd.xlane.f32.xlu0 %v291
    %v293 = vpop.xlane.xlu0 %292
    %v294 = vrot.slane %v293, 4
    %v295 = vadd.f32 %v293, %v294
    %v296 = vrot.slane %v295, 2
    %v297 = vadd.f32 %v295, %v296
    %v298 = vrot.slane %v297, 1
    %v299 = vadd.f32 %v297, %v298
    %s300 = vtos %v299
    %v301 = vstv %s300
    %v302 = vrcp.pop %v301
    %s303 = vtos %v302
    %s304 = smul.f32 %s220, %s303
    %v305 = vstv %s304
    %v306 = vmul.f32 %v305, %v208
    %v307 = vadd.f32 %v68, %v306
    %v308 = vmul.f32 %v305, %v288
    %v309 = vsub.f32 %v140, %v308
    %310 = vmatprep.subr.mxu0 0.0
    %311 = vmatpush1.msra.mxu0 %v52
    %312 = vmatprep.subr.mxu0 0.0
    %313 = vmatpush1.msra.mxu0 %v53
    %314 = vmatprep.subr.mxu0 0.0
    %315 = vmatpush1.msra.mxu0 %v54
    %316 = vmatprep.subr.mxu0 0.0
    %317 = vmatpush1.msra.mxu0 %v55
    %318 = vmatprep.subr.mxu0 0.0
    %319 = vmatpush1.msra.mxu0 %v56
    %320 = vmatprep.subr.mxu0 0.0
    %321 = vmatpush1.msra.mxu0 %v57
    %322 = vmatprep.subr.mxu0 0.0
    %323 = vmatpush1.msra.mxu0 %v58
    %324 = vmatprep.subr.mxu0 0.0
    %325 = vmatpush1.msra.mxu0 %v59
    %326 = vmatprep.subr.mxu0 0.0
    %327 = vmatpush1.msra.mxu0 %v60
    %328 = vmatprep.subr.mxu0 0.0
    %329 = vmatpush1.msra.mxu0 %v61
    %330 = vmatprep.subr.mxu0 0.0
    %331 = vmatpush1.msra.mxu0 %v62
    %332 = vmatprep.subr.mxu0 0.0
    %333 = vmatpush1.msra.mxu0 %v63
    %334 = vmatprep.subr.mxu0 0.0
    %335 = vmatpush1.msra.mxu0 %v64
    %336 = vmatprep.subr.mxu0 0.0
    %337 = vmatpush1.msra.mxu0 %v65
    %338 = vmatprep.subr.mxu0 0.0
    %339 = vmatpush1.msra.mxu0 %v66
    %340 = vmatprep.subr.mxu0 0.0
    %341 = vmatpush1.msra.mxu0 %v67
    %342 = vmatprep.subr.mxu0 0.0
    %343 = vmatpush1.msra.mxu0 0.0
    %344 = vmatprep.subr.mxu0 0.0
    %345 = vmatpush1.msra.mxu0 0.0
    %346 = vmatprep.subr.mxu0 0.0
    %347 = vmatpush1.msra.mxu0 0.0
    %348 = vmatprep.subr.mxu0 0.0
    %349 = vmatpush1.msra.mxu0 0.0
    %350 = vmatprep.subr.mxu0 0.0
    %351 = vmatpush1.msra.mxu0 0.0
    %352 = vmatprep.subr.mxu0 0.0
    %353 = vmatpush1.msra.mxu0 0.0
    %354 = vmatprep.subr.mxu0 0.0
    %355 = vmatpush1.msra.mxu0 0.0
    %356 = vmatprep.subr.mxu0 0.0
    %357 = vmatpush1.msra.mxu0 0.0
    %358 = vmatprep.subr.mxu0 0.0
    %359 = vmatpush1.msra.mxu0 0.0
    %360 = vmatprep.subr.mxu0 0.0
    %361 = vmatpush1.msra.mxu0 0.0
    %362 = vmatprep.subr.mxu0 0.0
    %363 = vmatpush1.msra.mxu0 0.0
    %364 = vmatprep.subr.mxu0 0.0
    %365 = vmatpush1.msra.mxu0 0.0
    %366 = vmatprep.subr.mxu0 0.0
    %367 = vmatpush1.msra.mxu0 0.0
    %368 = vmatprep.subr.mxu0 0.0
    %369 = vmatpush1.msra.mxu0 0.0
    %370 = vmatprep.subr.mxu0 0.0
    %371 = vmatpush1.msra.mxu0 0.0
    %372 = vmatprep.subr.mxu0 0.0
    %373 = vmatpush1.msra.mxu0 0.0
    %374 = vmatprep.mubr.f32.mxu0 0.0
    %375 = vmatmul.mubr.f32.gmra.mrb[0].mxu0 %v309
    %v376 = vpop.f32.mrb[0].mxu0
    %v377 = vadd.f32 0.0, %v376
    %v378 = vpop.f32.mrb[0].mxu0
    %379 = vdwg.mxu0
    %v380 = vmul.f32 %v377, %v377
    %381 = vadd.xlane.f32.xlu0 %v380
    %v382 = vpop.xlane.xlu0 %381
    %v383 = vrot.slane %v382, 4
    %v384 = vadd.f32 %v382, %v383
    %v385 = vrot.slane %v384, 2
    %v386 = vadd.f32 %v384, %v385
    %v387 = vrot.slane %v386, 1
    %v388 = vadd.f32 %v386, %v387
    %s389 = vtos %v388
    %v390 = vstv %s220
    %v391 = vrcp.pop %v390
    %s392 = vtos %v391
    %s393 = smul.f32 %s389, %s392
    %v394 = vstv %s393
    %v395 = vmul.f32 %v394, %v208
    %v396 = vadd.f32 %v377, %v395
    %397 = vmatprep.subr.mxu0 0.0
    %398 = vmatpush1.xpose.msra.mxu0 %v52
    %399 = vmatprep.subr.mxu0 0.0
    %400 = vmatpush1.xpose.msra.mxu0 %v53
    %401 = vmatprep.subr.mxu0 0.0
    %402 = vmatpush1.xpose.msra.mxu0 %v54
    %403 = vmatprep.subr.mxu0 0.0
    %404 = vmatpush1.xpose.msra.mxu0 %v55
    %405 = vmatprep.subr.mxu0 0.0
    %406 = vmatpush1.xpose.msra.mxu0 %v56
    %407 = vmatprep.subr.mxu0 0.0
    %408 = vmatpush1.xpose.msra.mxu0 %v57
    %409 = vmatprep.subr.mxu0 0.0
    %410 = vmatpush1.xpose.msra.mxu0 %v58
    %411 = vmatprep.subr.mxu0 0.0
    %412 = vmatpush1.xpose.msra.mxu0 %v59
    %413 = vmatprep.subr.mxu0 0.0
    %414 = vmatpush1.xpose.msra.mxu0 %v60
    %415 = vmatprep.subr.mxu0 0.0
    %416 = vmatpush1.xpose.msra.mxu0 %v61
    %417 = vmatprep.subr.mxu0 0.0
    %418 = vmatpush1.xpose.msra.mxu0 %v62
    %419 = vmatprep.subr.mxu0 0.0
    %420 = vmatpush1.xpose.msra.mxu0 %v63
    %421 = vmatprep.subr.mxu0 0.0
    %422 = vmatpush1.xpose.msra.mxu0 %v64
    %423 = vmatprep.subr.mxu0 0.0
    %424 = vmatpush1.xpose.msra.mxu0 %v65
    %425 = vmatprep.subr.mxu0 0.0
    %426 = vmatpush1.xpose.msra.mxu0 %v66
    %427 = vmatprep.subr.mxu0 0.0
    %428 = vmatpush1.xpose.msra.mxu0 %v67
    %429 = vmatprep.subr.mxu0 0.0
    %430 = vmatpush1.xpose.msra.mxu0 0.0
    %431 = vmatprep.subr.mxu0 0.0
    %432 = vmatpush1.xpose.msra.mxu0 0.0
    %433 = vmatprep.subr.mxu0 0.0
    %434 = vmatpush1.xpose.msra.mxu0 0.0
    %435 = vmatprep.subr.mxu0 0.0
    %436 = vmatpush1.xpose.msra.mxu0 0.0
    %437 = vmatprep.subr.mxu0 0.0
    %438 = vmatpush1.xpose.msra.mxu0 0.0
    %439 = vmatprep.subr.mxu0 0.0
    %440 = vmatpush1.xpose.msra.mxu0 0.0
    %441 = vmatprep.subr.mxu0 0.0
    %442 = vmatpush1.xpose.msra.mxu0 0.0
    %443 = vmatprep.subr.mxu0 0.0
    %444 = vmatpush1.xpose.msra.mxu0 0.0
    %445 = vmatprep.subr.mxu0 0.0
    %446 = vmatpush1.xpose.msra.mxu0 0.0
    %447 = vmatprep.subr.mxu0 0.0
    %448 = vmatpush1.xpose.msra.mxu0 0.0
    %449 = vmatprep.subr.mxu0 0.0
    %450 = vmatpush1.xpose.msra.mxu0 0.0
    %451 = vmatprep.subr.mxu0 0.0
    %452 = vmatpush1.xpose.msra.mxu0 0.0
    %453 = vmatprep.subr.mxu0 0.0
    %454 = vmatpush1.xpose.msra.mxu0 0.0
    %455 = vmatprep.subr.mxu0 0.0
    %456 = vmatpush1.xpose.msra.mxu0 0.0
    %457 = vmatprep.subr.mxu0 0.0
    %458 = vmatpush1.xpose.msra.mxu0 0.0
    %459 = vmatprep.subr.mxu0 0.0
    %460 = vmatpush1.xpose.msra.mxu0 0.0
    %461 = vmatprep.mubr.f32.mxu0 0.0
    %462 = vmatmul.mubr.f32.gmra.mrb[0].mxu0 %v396
    %v463 = vpop.f32.mrb[0].mxu0
    %v464 = vadd.f32 0.0, %v463
    %v465 = vpop.f32.mrb[0].mxu0
    %466 = vdwg.mxu0
    %v467 = vmul.f32 %v464, %v464
    %468 = vadd.xlane.f32.xlu0 %v467
    %v469 = vpop.xlane.xlu0 %468
    %v470 = vrot.slane %v469, 4
    %v471 = vadd.f32 %v469, %v470
    %v472 = vrot.slane %v471, 2
    %v473 = vadd.f32 %v471, %v472
    %v474 = vrot.slane %v473, 1
    %v475 = vadd.f32 %v473, %v474
    %s476 = vtos %v475
    %v477 = vstv %s476
    %v478 = vrcp.pop %v477
    %s479 = vtos %v478
    %s480 = smul.f32 %s389, %s479
    %v481 = vstv %s480
    %v482 = vmul.f32 %v481, %v396
    %v483 = vadd.f32 %v307, %v482
    %v484 = vmul.f32 %v481, %v464
    %v485 = vsub.f32 %v309, %v484
    %486 = vmatprep.subr.mxu0 0.0
    %487 = vmatpush1.msra.mxu0 %v52
    %488 = vmatprep.subr.mxu0 0.0
    %489 = vmatpush1.msra.mxu0 %v53
    %490 = vmatprep.subr.mxu0 0.0
    %491 = vmatpush1.msra.mxu0 %v54
    %492 = vmatprep.subr.mxu0 0.0
    %493 = vmatpush1.msra.mxu0 %v55
    %494 = vmatprep.subr.mxu0 0.0
    %495 = vmatpush1.msra.mxu0 %v56
    %496 = vmatprep.subr.mxu0 0.0
    %497 = vmatpush1.msra.mxu0 %v57
    %498 = vmatprep.subr.mxu0 0.0
    %499 = vmatpush1.msra.mxu0 %v58
    %500 = vmatprep.subr.mxu0 0.0
    %501 = vmatpush1.msra.mxu0 %v59
    %502 = vmatprep.subr.mxu0 0.0
    %503 = vmatpush1.msra.mxu0 %v60
    %504 = vmatprep.subr.mxu0 0.0
    %505 = vmatpush1.msra.mxu0 %v61
    %506 = vmatprep.subr.mxu0 0.0
    %507 = vmatpush1.msra.mxu0 %v62
    %508 = vmatprep.subr.mxu0 0.0
    %509 = vmatpush1.msra.mxu0 %v63
    %510 = vmatprep.subr.mxu0 0.0
    %511 = vmatpush1.msra.mxu0 %v64
    %512 = vmatprep.subr.mxu0 0.0
    %513 = vmatpush1.msra.mxu0 %v65
    %514 = vmatprep.subr.mxu0 0.0
    %515 = vmatpush1.msra.mxu0 %v66
    %516 = vmatprep.subr.mxu0 0.0
    %517 = vmatpush1.msra.mxu0 %v67
    %518 = vmatprep.subr.mxu0 0.0
    %519 = vmatpush1.msra.mxu0 0.0
    %520 = vmatprep.subr.mxu0 0.0
    %521 = vmatpush1.msra.mxu0 0.0
    %522 = vmatprep.subr.mxu0 0.0
    %523 = vmatpush1.msra.mxu0 0.0
    %524 = vmatprep.subr.mxu0 0.0
    %525 = vmatpush1.msra.mxu0 0.0
    %526 = vmatprep.subr.mxu0 0.0
    %527 = vmatpush1.msra.mxu0 0.0
    %528 = vmatprep.subr.mxu0 0.0
    %529 = vmatpush1.msra.mxu0 0.0
    %530 = vmatprep.subr.mxu0 0.0
    %531 = vmatpush1.msra.mxu0 0.0
    %532 = vmatprep.subr.mxu0 0.0
    %533 = vmatpush1.msra.mxu0 0.0
    %534 = vmatprep.subr.mxu0 0.0
    %535 = vmatpush1.msra.mxu0 0.0
    %536 = vmatprep.subr.mxu0 0.0
    %537 = vmatpush1.msra.mxu0 0.0
    %538 = vmatprep.subr.mxu0 0.0
    %539 = vmatpush1.msra.mxu0 0.0
    %540 = vmatprep.subr.mxu0 0.0
    %541 = vmatpush1.msra.mxu0 0.0
    %542 = vmatprep.subr.mxu0 0.0
    %543 = vmatpush1.msra.mxu0 0.0
    %544 = vmatprep.subr.mxu0 0.0
    %545 = vmatpush1.msra.mxu0 0.0
    %546 = vmatprep.subr.mxu0 0.0
    %547 = vmatpush1.msra.mxu0 0.0
    %548 = vmatprep.subr.mxu0 0.0
    %549 = vmatpush1.msra.mxu0 0.0
    %550 = vmatprep.mubr.f32.mxu0 0.0
    %551 = vmatmul.mubr.f32.gmra.mrb[0].mxu0 %v485
    %v552 = vpop.f32.mrb[0].mxu0
    %v553 = vadd.f32 0.0, %v552
    %v554 = vpop.f32.mrb[0].mxu0
    %555 = vdwg.mxu0
    %v556 = vmul.f32 %v553, %v553
    %557 = vadd.xlane.f32.xlu0 %v556
    %v558 = vpop.xlane.xlu0 %557
    %v559 = vrot.slane %v558, 4
    %v560 = vadd.f32 %v558, %v559
    %v561 = vrot.slane %v560, 2
    %v562 = vadd.f32 %v560, %v561
    %v563 = vrot.slane %v562, 1
    %v564 = vadd.f32 %v562, %v563
    %s565 = vtos %v564
    %v566 = vstv %s389
    %v567 = vrcp.pop %v566
    %s568 = vtos %v567
    %s569 = smul.f32 %s565, %s568
    %v570 = vstv %s569
    %v571 = vmul.f32 %v570, %v396
    %v572 = vadd.f32 %v553, %v571
    %573 = vmatprep.subr.mxu0 0.0
    %574 = vmatpush1.xpose.msra.mxu0 %v52
    %575 = vmatprep.subr.mxu0 0.0
    %576 = vmatpush1.xpose.msra.mxu0 %v53
    %577 = vmatprep.subr.mxu0 0.0
    %578 = vmatpush1.xpose.msra.mxu0 %v54
    %579 = vmatprep.subr.mxu0 0.0
    %580 = vmatpush1.xpose.msra.mxu0 %v55
    %581 = vmatprep.subr.mxu0 0.0
    %582 = vmatpush1.xpose.msra.mxu0 %v56
    %583 = vmatprep.subr.mxu0 0.0
    %584 = vmatpush1.xpose.msra.mxu0 %v57
    %585 = vmatprep.subr.mxu0 0.0
    %586 = vmatpush1.xpose.msra.mxu0 %v58
    %587 = vmatprep.subr.mxu0 0.0
    %588 = vmatpush1.xpose.msra.mxu0 %v59
    %589 = vmatprep.subr.mxu0 0.0
    %590 = vmatpush1.xpose.msra.mxu0 %v60
    %591 = vmatprep.subr.mxu0 0.0
    %592 = vmatpush1.xpose.msra.mxu0 %v61
    %593 = vmatprep.subr.mxu0 0.0
    %594 = vmatpush1.xpose.msra.mxu0 %v62
    %595 = vmatprep.subr.mxu0 0.0
    %596 = vmatpush1.xpose.msra.mxu0 %v63
    %597 = vmatprep.subr.mxu0 0.0
    %598 = vmatpush1.xpose.msra.mxu0 %v64
    %599 = vmatprep.subr.mxu0 0.0
    %600 = vmatpush1.xpose.msra.mxu0 %v65
    %601 = vmatprep.subr.mxu0 0.0
    %602 = vmatpush1.xpose.msra.mxu0 %v66
    %603 = vmatprep.subr.mxu0 0.0
    %604 = vmatpush1.xpose.msra.mxu0 %v67
    %605 = vmatprep.subr.mxu0 0.0
    %606 = vmatpush1.xpose.msra.mxu0 0.0
    %607 = vmatprep.subr.mxu0 0.0
    %608 = vmatpush1.xpose.msra.mxu0 0.0
    %609 = vmatprep.subr.mxu0 0.0
    %610 = vmatpush1.xpose.msra.mxu0 0.0
    %611 = vmatprep.subr.mxu0 0.0
    %612 = vmatpush1.xpose.msra.mxu0 0.0
    %613 = vmatprep.subr.mxu0 0.0
    %614 = vmatpush1.xpose.msra.mxu0 0.0
    %615 = vmatprep.subr.mxu0 0.0
    %616 = vmatpush1.xpose.msra.mxu0 0.0
    %617 = vmatprep.subr.mxu0 0.0
    %618 = vmatpush1.xpose.msra.mxu0 0.0
    %619 = vmatprep.subr.mxu0 0.0
    %620 = vmatpush1.xpose.msra.mxu0 0.0
    %621 = vmatprep.subr.mxu0 0.0
    %622 = vmatpush1.xpose.msra.mxu0 0.0
    %623 = vmatprep.subr.mxu0 0.0
    %624 = vmatpush1.xpose.msra.mxu0 0.0
    %625 = vmatprep.subr.mxu0 0.0
    %626 = vmatpush1.xpose.msra.mxu0 0.0
    %627 = vmatprep.subr.mxu0 0.0
    %628 = vmatpush1.xpose.msra.mxu0 0.0
    %629 = vmatprep.subr.mxu0 0.0
    %630 = vmatpush1.xpose.msra.mxu0 0.0
    %631 = vmatprep.subr.mxu0 0.0
    %632 = vmatpush1.xpose.msra.mxu0 0.0
    %633 = vmatprep.subr.mxu0 0.0
    %634 = vmatpush1.xpose.msra.mxu0 0.0
    %635 = vmatprep.subr.mxu0 0.0
    %636 = vmatpush1.xpose.msra.mxu0 0.0
    %637 = vmatprep.mubr.f32.mxu0 0.0
    %638 = vmatmul.mubr.f32.gmra.mrb[0].mxu0 %v572
    %v639 = vpop.f32.mrb[0].mxu0
    %v640 = vadd.f32 0.0, %v639
    %v641 = vpop.f32.mrb[0].mxu0
    %642 = vdwg.mxu0
    %v643 = vmul.f32 %v640, %v640
    %644 = vadd.xlane.f32.xlu0 %v643
    %v645 = vpop.xlane.xlu0 %644
    %v646 = vrot.slane %v645, 4
    %v647 = vadd.f32 %v645, %v646
    %v648 = vrot.slane %v647, 2
    %v649 = vadd.f32 %v647, %v648
    %v650 = vrot.slane %v649, 1
    %v651 = vadd.f32 %v649, %v650
    %s652 = vtos %v651
    %v653 = vstv %s652
    %v654 = vrcp.pop %v653
    %s655 = vtos %v654
    %s656 = smul.f32 %s565, %s655
    %v657 = vstv %s656
    %v658 = vmul.f32 %v657, %v572
    %v659 = vadd.f32 %v483, %v658
    %v660 = vmul.f32 %v657, %v640
    %v661 = vsub.f32 %v485, %v660
    %662 = vmatprep.subr.mxu0 0.0
    %663 = vmatpush1.msra.mxu0 %v52
    %664 = vmatprep.subr.mxu0 0.0
    %665 = vmatpush1.msra.mxu0 %v53
    %666 = vmatprep.subr.mxu0 0.0
    %667 = vmatpush1.msra.mxu0 %v54
    %668 = vmatprep.subr.mxu0 0.0
    %669 = vmatpush1.msra.mxu0 %v55
    %670 = vmatprep.subr.mxu0 0.0
    %671 = vmatpush1.msra.mxu0 %v56
    %672 = vmatprep.subr.mxu0 0.0
    %673 = vmatpush1.msra.mxu0 %v57
    %674 = vmatprep.subr.mxu0 0.0
    %675 = vmatpush1.msra.mxu0 %v58
    %676 = vmatprep.subr.mxu0 0.0
    %677 = vmatpush1.msra.mxu0 %v59
    %678 = vmatprep.subr.mxu0 0.0
    %679 = vmatpush1.msra.mxu0 %v60
    %680 = vmatprep.subr.mxu0 0.0
    %681 = vmatpush1.msra.mxu0 %v61
    %682 = vmatprep.subr.mxu0 0.0
    %683 = vmatpush1.msra.mxu0 %v62
    %684 = vmatprep.subr.mxu0 0.0
    %685 = vmatpush1.msra.mxu0 %v63
    %686 = vmatprep.subr.mxu0 0.0
    %687 = vmatpush1.msra.mxu0 %v64
    %688 = vmatprep.subr.mxu0 0.0
    %689 = vmatpush1.msra.mxu0 %v65
    %690 = vmatprep.subr.mxu0 0.0
    %691 = vmatpush1.msra.mxu0 %v66
    %692 = vmatprep.subr.mxu0 0.0
    %693 = vmatpush1.msra.mxu0 %v67
    %694 = vmatprep.subr.mxu0 0.0
    %695 = vmatpush1.msra.mxu0 0.0
    %696 = vmatprep.subr.mxu0 0.0
    %697 = vmatpush1.msra.mxu0 0.0
    %698 = vmatprep.subr.mxu0 0.0
    %699 = vmatpush1.msra.mxu0 0.0
    %700 = vmatprep.subr.mxu0 0.0
    %701 = vmatpush1.msra.mxu0 0.0
    %702 = vmatprep.subr.mxu0 0.0
    %703 = vmatpush1.msra.mxu0 0.0
    %704 = vmatprep.subr.mxu0 0.0
    %705 = vmatpush1.msra.mxu0 0.0
    %706 = vmatprep.subr.mxu0 0.0
    %707 = vmatpush1.msra.mxu0 0.0
    %708 = vmatprep.subr.mxu0 0.0
    %709 = vmatpush1.msra.mxu0 0.0
    %710 = vmatprep.subr.mxu0 0.0
    %711 = vmatpush1.msra.mxu0 0.0
    %712 = vmatprep.subr.mxu0 0.0
    %713 = vmatpush1.msra.mxu0 0.0
    %714 = vmatprep.subr.mxu0 0.0
    %715 = vmatpush1.msra.mxu0 0.0
    %716 = vmatprep.subr.mxu0 0.0
    %717 = vmatpush1.msra.mxu0 0.0
    %718 = vmatprep.subr.mxu0 0.0
    %719 = vmatpush1.msra.mxu0 0.0
    %720 = vmatprep.subr.mxu0 0.0
    %721 = vmatpush1.msra.mxu0 0.0
    %722 = vmatprep.subr.mxu0 0.0
    %723 = vmatpush1.msra.mxu0 0.0
    %724 = vmatprep.subr.mxu0 0.0
    %725 = vmatpush1.msra.mxu0 0.0
    %726 = vmatprep.mubr.f32.mxu0 0.0
    %727 = vmatmul.mubr.f32.gmra.mrb[0].mxu0 %v661
    %v728 = vpop.f32.mrb[0].mxu0
    %v729 = vadd.f32 0.0, %v728
    %v730 = vpop.f32.mrb[0].mxu0
    %731 = vdwg.mxu0
    %v732 = vmul.f32 %v729, %v729
    %733 = vadd.xlane.f32.xlu0 %v732
    %v734 = vpop.xlane.xlu0 %733
    %v735 = vrot.slane %v734, 4
    %v736 = vadd.f32 %v734, %v735
    %v737 = vrot.slane %v736, 2
    %v738 = vadd.f32 %v736, %v737
    %v739 = vrot.slane %v738, 1
    %v740 = vadd.f32 %v738, %v739
    %s741 = vtos %v740
    %v742 = vstv %s565
    %v743 = vrcp.pop %v742
    %s744 = vtos %v743
    %s745 = smul.f32 %s741, %s744
    %v746 = vstv %s745
    %v747 = vmul.f32 %v746, %v572
    %v748 = vadd.f32 %v729, %v747
    %749 = vmatprep.subr.mxu0 0.0
    %750 = vmatpush1.xpose.msra.mxu0 %v52
    %751 = vmatprep.subr.mxu0 0.0
    %752 = vmatpush1.xpose.msra.mxu0 %v53
    %753 = vmatprep.subr.mxu0 0.0
    %754 = vmatpush1.xpose.msra.mxu0 %v54
    %755 = vmatprep.subr.mxu0 0.0
    %756 = vmatpush1.xpose.msra.mxu0 %v55
    %757 = vmatprep.subr.mxu0 0.0
    %758 = vmatpush1.xpose.msra.mxu0 %v56
    %759 = vmatprep.subr.mxu0 0.0
    %760 = vmatpush1.xpose.msra.mxu0 %v57
    %761 = vmatprep.subr.mxu0 0.0
    %762 = vmatpush1.xpose.msra.mxu0 %v58
    %763 = vmatprep.subr.mxu0 0.0
    %764 = vmatpush1.xpose.msra.mxu0 %v59
    %765 = vmatprep.subr.mxu0 0.0
    %766 = vmatpush1.xpose.msra.mxu0 %v60
    %767 = vmatprep.subr.mxu0 0.0
    %768 = vmatpush1.xpose.msra.mxu0 %v61
    %769 = vmatprep.subr.mxu0 0.0
    %770 = vmatpush1.xpose.msra.mxu0 %v62
    %771 = vmatprep.subr.mxu0 0.0
    %772 = vmatpush1.xpose.msra.mxu0 %v63
    %773 = vmatprep.subr.mxu0 0.0
    %774 = vmatpush1.xpose.msra.mxu0 %v64
    %775 = vmatprep.subr.mxu0 0.0
    %776 = vmatpush1.xpose.msra.mxu0 %v65
    %777 = vmatprep.subr.mxu0 0.0
    %778 = vmatpush1.xpose.msra.mxu0 %v66
    %779 = vmatprep.subr.mxu0 0.0
    %780 = vmatpush1.xpose.msra.mxu0 %v67
    %781 = vmatprep.subr.mxu0 0.0
    %782 = vmatpush1.xpose.msra.mxu0 0.0
    %783 = vmatprep.subr.mxu0 0.0
    %784 = vmatpush1.xpose.msra.mxu0 0.0
    %785 = vmatprep.subr.mxu0 0.0
    %786 = vmatpush1.xpose.msra.mxu0 0.0
    %787 = vmatprep.subr.mxu0 0.0
    %788 = vmatpush1.xpose.msra.mxu0 0.0
    %789 = vmatprep.subr.mxu0 0.0
    %790 = vmatpush1.xpose.msra.mxu0 0.0
    %791 = vmatprep.subr.mxu0 0.0
    %792 = vmatpush1.xpose.msra.mxu0 0.0
    %793 = vmatprep.subr.mxu0 0.0
    %794 = vmatpush1.xpose.msra.mxu0 0.0
    %795 = vmatprep.subr.mxu0 0.0
    %796 = vmatpush1.xpose.msra.mxu0 0.0
    %797 = vmatprep.subr.mxu0 0.0
    %798 = vmatpush1.xpose.msra.mxu0 0.0
    %799 = vmatprep.subr.mxu0 0.0
    %800 = vmatpush1.xpose.msra.mxu0 0.0
    %801 = vmatprep.subr.mxu0 0.0
    %802 = vmatpush1.xpose.msra.mxu0 0.0
    %803 = vmatprep.subr.mxu0 0.0
    %804 = vmatpush1.xpose.msra.mxu0 0.0
    %805 = vmatprep.subr.mxu0 0.0
    %806 = vmatpush1.xpose.msra.mxu0 0.0
    %807 = vmatprep.subr.mxu0 0.0
    %808 = vmatpush1.xpose.msra.mxu0 0.0
    %809 = vmatprep.subr.mxu0 0.0
    %810 = vmatpush1.xpose.msra.mxu0 0.0
    %811 = vmatprep.subr.mxu0 0.0
    %812 = vmatpush1.xpose.msra.mxu0 0.0
    %813 = vmatprep.mubr.f32.mxu0 0.0
    %814 = vmatmul.mubr.f32.gmra.mrb[0].mxu0 %v748
    %v815 = vpop.f32.mrb[0].mxu0
    %v816 = vadd.f32 0.0, %v815
    %v817 = vpop.f32.mrb[0].mxu0
    %818 = vdwg.mxu0
    %v819 = vmul.f32 %v816, %v816
    %820 = vadd.xlane.f32.xlu0 %v819
    %v821 = vpop.xlane.xlu0 %820
    %v822 = vrot.slane %v821, 4
    %v823 = vadd.f32 %v821, %v822
    %v824 = vrot.slane %v823, 2
    %v825 = vadd.f32 %v823, %v824
    %v826 = vrot.slane %v825, 1
    %v827 = vadd.f32 %v825, %v826
    %s828 = vtos %v827
    %v829 = vstv %s828
    %v830 = vrcp.pop %v829
    %s831 = vtos %v830
    %s832 = smul.f32 %s741, %s831
    %v833 = vstv %s832
    %v834 = vmul.f32 %v833, %v748
    %v835 = vadd.f32 %v659, %v834
    %v836 = vmul.f32 %v833, %v816
    %v837 = vsub.f32 %v661, %v836
    %838 = vmatprep.subr.mxu0 0.0
    %839 = vmatpush1.msra.mxu0 %v52
    %840 = vmatprep.subr.mxu0 0.0
    %841 = vmatpush1.msra.mxu0 %v53
    %842 = vmatprep.subr.mxu0 0.0
    %843 = vmatpush1.msra.mxu0 %v54
    %844 = vmatprep.subr.mxu0 0.0
    %845 = vmatpush1.msra.mxu0 %v55
    %846 = vmatprep.subr.mxu0 0.0
    %847 = vmatpush1.msra.mxu0 %v56
    %848 = vmatprep.subr.mxu0 0.0
    %849 = vmatpush1.msra.mxu0 %v57
    %850 = vmatprep.subr.mxu0 0.0
    %851 = vmatpush1.msra.mxu0 %v58
    %852 = vmatprep.subr.mxu0 0.0
    %853 = vmatpush1.msra.mxu0 %v59
    %854 = vmatprep.subr.mxu0 0.0
    %855 = vmatpush1.msra.mxu0 %v60
    %856 = vmatprep.subr.mxu0 0.0
    %857 = vmatpush1.msra.mxu0 %v61
    %858 = vmatprep.subr.mxu0 0.0
    %859 = vmatpush1.msra.mxu0 %v62
    %860 = vmatprep.subr.mxu0 0.0
    %861 = vmatpush1.msra.mxu0 %v63
    %862 = vmatprep.subr.mxu0 0.0
    %863 = vmatpush1.msra.mxu0 %v64
    %864 = vmatprep.subr.mxu0 0.0
    %865 = vmatpush1.msra.mxu0 %v65
    %866 = vmatprep.subr.mxu0 0.0
    %867 = vmatpush1.msra.mxu0 %v66
    %868 = vmatprep.subr.mxu0 0.0
    %869 = vmatpush1.msra.mxu0 %v67
    %870 = vmatprep.subr.mxu0 0.0
    %871 = vmatpush1.msra.mxu0 0.0
    %872 = vmatprep.subr.mxu0 0.0
    %873 = vmatpush1.msra.mxu0 0.0
    %874 = vmatprep.subr.mxu0 0.0
    %875 = vmatpush1.msra.mxu0 0.0
    %876 = vmatprep.subr.mxu0 0.0
    %877 = vmatpush1.msra.mxu0 0.0
    %878 = vmatprep.subr.mxu0 0.0
    %879 = vmatpush1.msra.mxu0 0.0
    %880 = vmatprep.subr.mxu0 0.0
    %881 = vmatpush1.msra.mxu0 0.0
    %882 = vmatprep.subr.mxu0 0.0
    %883 = vmatpush1.msra.mxu0 0.0
    %884 = vmatprep.subr.mxu0 0.0
    %885 = vmatpush1.msra.mxu0 0.0
    %886 = vmatprep.subr.mxu0 0.0
    %887 = vmatpush1.msra.mxu0 0.0
    %888 = vmatprep.subr.mxu0 0.0
    %889 = vmatpush1.msra.mxu0 0.0
    %890 = vmatprep.subr.mxu0 0.0
    %891 = vmatpush1.msra.mxu0 0.0
    %892 = vmatprep.subr.mxu0 0.0
    %893 = vmatpush1.msra.mxu0 0.0
    %894 = vmatprep.subr.mxu0 0.0
    %895 = vmatpush1.msra.mxu0 0.0
    %896 = vmatprep.subr.mxu0 0.0
    %897 = vmatpush1.msra.mxu0 0.0
    %898 = vmatprep.subr.mxu0 0.0
    %899 = vmatpush1.msra.mxu0 0.0
    %900 = vmatprep.subr.mxu0 0.0
    %901 = vmatpush1.msra.mxu0 0.0
    %902 = vmatprep.mubr.f32.mxu0 0.0
    %903 = vmatmul.mubr.f32.gmra.mrb[0].mxu0 %v837
    %v904 = vpop.f32.mrb[0].mxu0
    %v905 = vadd.f32 0.0, %v904
    %v906 = vpop.f32.mrb[0].mxu0
    %907 = vdwg.mxu0
    %v908 = vmul.f32 %v905, %v905
    %909 = vadd.xlane.f32.xlu0 %v908
    %v910 = vpop.xlane.xlu0 %909
    %v911 = vrot.slane %v910, 4
    %v912 = vadd.f32 %v910, %v911
    %v913 = vrot.slane %v912, 2
    %v914 = vadd.f32 %v912, %v913
    %v915 = vrot.slane %v914, 1
    %v916 = vadd.f32 %v914, %v915
    %s917 = vtos %v916
    %v918 = vstv %s741
    %v919 = vrcp.pop %v918
    %s920 = vtos %v919
    %s921 = smul.f32 %s917, %s920
    %v922 = vstv %s921
    %v923 = vmul.f32 %v922, %v748
    %v924 = vadd.f32 %v905, %v923
    %925 = vmatprep.subr.mxu0 0.0
    %926 = vmatpush1.xpose.msra.mxu0 %v52
    %927 = vmatprep.subr.mxu0 0.0
    %928 = vmatpush1.xpose.msra.mxu0 %v53
    %929 = vmatprep.subr.mxu0 0.0
    %930 = vmatpush1.xpose.msra.mxu0 %v54
    %931 = vmatprep.subr.mxu0 0.0
    %932 = vmatpush1.xpose.msra.mxu0 %v55
    %933 = vmatprep.subr.mxu0 0.0
    %934 = vmatpush1.xpose.msra.mxu0 %v56
    %935 = vmatprep.subr.mxu0 0.0
    %936 = vmatpush1.xpose.msra.mxu0 %v57
    %937 = vmatprep.subr.mxu0 0.0
    %938 = vmatpush1.xpose.msra.mxu0 %v58
    %939 = vmatprep.subr.mxu0 0.0
    %940 = vmatpush1.xpose.msra.mxu0 %v59
    %941 = vmatprep.subr.mxu0 0.0
    %942 = vmatpush1.xpose.msra.mxu0 %v60
    %943 = vmatprep.subr.mxu0 0.0
    %944 = vmatpush1.xpose.msra.mxu0 %v61
    %945 = vmatprep.subr.mxu0 0.0
    %946 = vmatpush1.xpose.msra.mxu0 %v62
    %947 = vmatprep.subr.mxu0 0.0
    %948 = vmatpush1.xpose.msra.mxu0 %v63
    %949 = vmatprep.subr.mxu0 0.0
    %950 = vmatpush1.xpose.msra.mxu0 %v64
    %951 = vmatprep.subr.mxu0 0.0
    %952 = vmatpush1.xpose.msra.mxu0 %v65
    %953 = vmatprep.subr.mxu0 0.0
    %954 = vmatpush1.xpose.msra.mxu0 %v66
    %955 = vmatprep.subr.mxu0 0.0
    %956 = vmatpush1.xpose.msra.mxu0 %v67
    %957 = vmatprep.subr.mxu0 0.0
    %958 = vmatpush1.xpose.msra.mxu0 0.0
    %959 = vmatprep.subr.mxu0 0.0
    %960 = vmatpush1.xpose.msra.mxu0 0.0
    %961 = vmatprep.subr.mxu0 0.0
    %962 = vmatpush1.xpose.msra.mxu0 0.0
    %963 = vmatprep.subr.mxu0 0.0
    %964 = vmatpush1.xpose.msra.mxu0 0.0
    %965 = vmatprep.subr.mxu0 0.0
    %966 = vmatpush1.xpose.msra.mxu0 0.0
    %967 = vmatprep.subr.mxu0 0.0
    %968 = vmatpush1.xpose.msra.mxu0 0.0
    %969 = vmatprep.subr.mxu0 0.0
    %970 = vmatpush1.xpose.msra.mxu0 0.0
    %971 = vmatprep.subr.mxu0 0.0
    %972 = vmatpush1.xpose.msra.mxu0 0.0
    %973 = vmatprep.subr.mxu0 0.0
    %974 = vmatpush1.xpose.msra.mxu0 0.0
    %975 = vmatprep.subr.mxu0 0.0
    %976 = vmatpush1.xpose.msra.mxu0 0.0
    %977 = vmatprep.subr.mxu0 0.0
    %978 = vmatpush1.xpose.msra.mxu0 0.0
    %979 = vmatprep.subr.mxu0 0.0
    %980 = vmatpush1.xpose.msra.mxu0 0.0
    %981 = vmatprep.subr.mxu0 0.0
    %982 = vmatpush1.xpose.msra.mxu0 0.0
    %983 = vmatprep.subr.mxu0 0.0
    %984 = vmatpush1.xpose.msra.mxu0 0.0
    %985 = vmatprep.subr.mxu0 0.0
    %986 = vmatpush1.xpose.msra.mxu0 0.0
    %987 = vmatprep.subr.mxu0 0.0
    %988 = vmatpush1.xpose.msra.mxu0 0.0
    %989 = vmatprep.mubr.f32.mxu0 0.0
    %990 = vmatmul.mubr.f32.gmra.mrb[0].mxu0 %v924
    %v991 = vpop.f32.mrb[0].mxu0
    %v992 = vadd.f32 0.0, %v991
    %v993 = vpop.f32.mrb[0].mxu0
    %994 = vdwg.mxu0
    %v995 = vmul.f32 %v992, %v992
    %996 = vadd.xlane.f32.xlu0 %v995
    %v997 = vpop.xlane.xlu0 %996
    %v998 = vrot.slane %v997, 4
    %v999 = vadd.f32 %v997, %v998
    %v1000 = vrot.slane %v999, 2
    %v1001 = vadd.f32 %v999, %v1000
    %v1002 = vrot.slane %v1001, 1
    %v1003 = vadd.f32 %v1001, %v1002
    %s1004 = vtos %v1003
    %v1005 = vstv %s1004
    %v1006 = vrcp.pop %v1005
    %s1007 = vtos %v1006
    %s1008 = smul.f32 %s917, %s1007
    %v1009 = vstv %s1008
    %v1010 = vmul.f32 %v1009, %v924
    %v1011 = vadd.f32 %v835, %v1010
    %v1012 = vmul.f32 %v1009, %v992
    %v1013 = vsub.f32 %v837, %v1012
    %1014 = vmatprep.subr.mxu0 0.0
    %1015 = vmatpush1.msra.mxu0 %v52
    %1016 = vmatprep.subr.mxu0 0.0
    %1017 = vmatpush1.msra.mxu0 %v53
    %1018 = vmatprep.subr.mxu0 0.0
    %1019 = vmatpush1.msra.mxu0 %v54
    %1020 = vmatprep.subr.mxu0 0.0
    %1021 = vmatpush1.msra.mxu0 %v55
    %1022 = vmatprep.subr.mxu0 0.0
    %1023 = vmatpush1.msra.mxu0 %v56
    %1024 = vmatprep.subr.mxu0 0.0
    %1025 = vmatpush1.msra.mxu0 %v57
    %1026 = vmatprep.subr.mxu0 0.0
    %1027 = vmatpush1.msra.mxu0 %v58
    %1028 = vmatprep.subr.mxu0 0.0
    %1029 = vmatpush1.msra.mxu0 %v59
    %1030 = vmatprep.subr.mxu0 0.0
    %1031 = vmatpush1.msra.mxu0 %v60
    %1032 = vmatprep.subr.mxu0 0.0
    %1033 = vmatpush1.msra.mxu0 %v61
    %1034 = vmatprep.subr.mxu0 0.0
    %1035 = vmatpush1.msra.mxu0 %v62
    %1036 = vmatprep.subr.mxu0 0.0
    %1037 = vmatpush1.msra.mxu0 %v63
    %1038 = vmatprep.subr.mxu0 0.0
    %1039 = vmatpush1.msra.mxu0 %v64
    %1040 = vmatprep.subr.mxu0 0.0
    %1041 = vmatpush1.msra.mxu0 %v65
    %1042 = vmatprep.subr.mxu0 0.0
    %1043 = vmatpush1.msra.mxu0 %v66
    %1044 = vmatprep.subr.mxu0 0.0
    %1045 = vmatpush1.msra.mxu0 %v67
    %1046 = vmatprep.subr.mxu0 0.0
    %1047 = vmatpush1.msra.mxu0 0.0
    %1048 = vmatprep.subr.mxu0 0.0
    %1049 = vmatpush1.msra.mxu0 0.0
    %1050 = vmatprep.subr.mxu0 0.0
    %1051 = vmatpush1.msra.mxu0 0.0
    %1052 = vmatprep.subr.mxu0 0.0
    %1053 = vmatpush1.msra.mxu0 0.0
    %1054 = vmatprep.subr.mxu0 0.0
    %1055 = vmatpush1.msra.mxu0 0.0
    %1056 = vmatprep.subr.mxu0 0.0
    %1057 = vmatpush1.msra.mxu0 0.0
    %1058 = vmatprep.subr.mxu0 0.0
    %1059 = vmatpush1.msra.mxu0 0.0
    %1060 = vmatprep.subr.mxu0 0.0
    %1061 = vmatpush1.msra.mxu0 0.0
    %1062 = vmatprep.subr.mxu0 0.0
    %1063 = vmatpush1.msra.mxu0 0.0
    %1064 = vmatprep.subr.mxu0 0.0
    %1065 = vmatpush1.msra.mxu0 0.0
    %1066 = vmatprep.subr.mxu0 0.0
    %1067 = vmatpush1.msra.mxu0 0.0
    %1068 = vmatprep.subr.mxu0 0.0
    %1069 = vmatpush1.msra.mxu0 0.0
    %1070 = vmatprep.subr.mxu0 0.0
    %1071 = vmatpush1.msra.mxu0 0.0
    %1072 = vmatprep.subr.mxu0 0.0
    %1073 = vmatpush1.msra.mxu0 0.0
    %1074 = vmatprep.subr.mxu0 0.0
    %1075 = vmatpush1.msra.mxu0 0.0
    %1076 = vmatprep.subr.mxu0 0.0
    %1077 = vmatpush1.msra.mxu0 0.0
    %1078 = vmatprep.mubr.f32.mxu0 0.0
    %1079 = vmatmul.mubr.f32.gmra.mrb[0].mxu0 %v1013
    %v1080 = vpop.f32.mrb[0].mxu0
    %v1081 = vadd.f32 0.0, %v1080
    %v1082 = vpop.f32.mrb[0].mxu0
    %1083 = vdwg.mxu0
    %v1084 = vmul.f32 %v1081, %v1081
    %1085 = vadd.xlane.f32.xlu0 %v1084
    %v1086 = vpop.xlane.xlu0 %1085
    %v1087 = vrot.slane %v1086, 4
    %v1088 = vadd.f32 %v1086, %v1087
    %v1089 = vrot.slane %v1088, 2
    %v1090 = vadd.f32 %v1088, %v1089
    %v1091 = vrot.slane %v1090, 1
    %v1092 = vadd.f32 %v1090, %v1091
    %s1093 = vtos %v1092
    %v1094 = vstv %s917
    %v1095 = vrcp.pop %v1094
    %s1096 = vtos %v1095
    %s1097 = smul.f32 %s1093, %s1096
    %v1098 = vstv %s1097
    %v1099 = vmul.f32 %v1098, %v924
    %v1100 = vadd.f32 %v1081, %v1099
    %1101 = vmatprep.subr.mxu0 0.0
    %1102 = vmatpush1.xpose.msra.mxu0 %v52
    %1103 = vmatprep.subr.mxu0 0.0
    %1104 = vmatpush1.xpose.msra.mxu0 %v53
    %1105 = vmatprep.subr.mxu0 0.0
    %1106 = vmatpush1.xpose.msra.mxu0 %v54
    %1107 = vmatprep.subr.mxu0 0.0
    %1108 = vmatpush1.xpose.msra.mxu0 %v55
    %1109 = vmatprep.subr.mxu0 0.0
    %1110 = vmatpush1.xpose.msra.mxu0 %v56
    %1111 = vmatprep.subr.mxu0 0.0
    %1112 = vmatpush1.xpose.msra.mxu0 %v57
    %1113 = vmatprep.subr.mxu0 0.0
    %1114 = vmatpush1.xpose.msra.mxu0 %v58
    %1115 = vmatprep.subr.mxu0 0.0
    %1116 = vmatpush1.xpose.msra.mxu0 %v59
    %1117 = vmatprep.subr.mxu0 0.0
    %1118 = vmatpush1.xpose.msra.mxu0 %v60
    %1119 = vmatprep.subr.mxu0 0.0
    %1120 = vmatpush1.xpose.msra.mxu0 %v61
    %1121 = vmatprep.subr.mxu0 0.0
    %1122 = vmatpush1.xpose.msra.mxu0 %v62
    %1123 = vmatprep.subr.mxu0 0.0
    %1124 = vmatpush1.xpose.msra.mxu0 %v63
    %1125 = vmatprep.subr.mxu0 0.0
    %1126 = vmatpush1.xpose.msra.mxu0 %v64
    %1127 = vmatprep.subr.mxu0 0.0
    %1128 = vmatpush1.xpose.msra.mxu0 %v65
    %1129 = vmatprep.subr.mxu0 0.0
    %1130 = vmatpush1.xpose.msra.mxu0 %v66
    %1131 = vmatprep.subr.mxu0 0.0
    %1132 = vmatpush1.xpose.msra.mxu0 %v67
    %1133 = vmatprep.subr.mxu0 0.0
    %1134 = vmatpush1.xpose.msra.mxu0 0.0
    %1135 = vmatprep.subr.mxu0 0.0
    %1136 = vmatpush1.xpose.msra.mxu0 0.0
    %1137 = vmatprep.subr.mxu0 0.0
    %1138 = vmatpush1.xpose.msra.mxu0 0.0
    %1139 = vmatprep.subr.mxu0 0.0
    %1140 = vmatpush1.xpose.msra.mxu0 0.0
    %1141 = vmatprep.subr.mxu0 0.0
    %1142 = vmatpush1.xpose.msra.mxu0 0.0
    %1143 = vmatprep.subr.mxu0 0.0
    %1144 = vmatpush1.xpose.msra.mxu0 0.0
    %1145 = vmatprep.subr.mxu0 0.0
    %1146 = vmatpush1.xpose.msra.mxu0 0.0
    %1147 = vmatprep.subr.mxu0 0.0
    %1148 = vmatpush1.xpose.msra.mxu0 0.0
    %1149 = vmatprep.subr.mxu0 0.0
    %1150 = vmatpush1.xpose.msra.mxu0 0.0
    %1151 = vmatprep.subr.mxu0 0.0
    %1152 = vmatpush1.xpose.msra.mxu0 0.0
    %1153 = vmatprep.subr.mxu0 0.0
    %1154 = vmatpush1.xpose.msra.mxu0 0.0
    %1155 = vmatprep.subr.mxu0 0.0
    %1156 = vmatpush1.xpose.msra.mxu0 0.0
    %1157 = vmatprep.subr.mxu0 0.0
    %1158 = vmatpush1.xpose.msra.mxu0 0.0
    %1159 = vmatprep.subr.mxu0 0.0
    %1160 = vmatpush1.xpose.msra.mxu0 0.0
    %1161 = vmatprep.subr.mxu0 0.0
    %1162 = vmatpush1.xpose.msra.mxu0 0.0
    %1163 = vmatprep.subr.mxu0 0.0
    %1164 = vmatpush1.xpose.msra.mxu0 0.0
    %1165 = vmatprep.mubr.f32.mxu0 0.0
    %1166 = vmatmul.mubr.f32.gmra.mrb[0].mxu0 %v1100
    %v1167 = vpop.f32.mrb[0].mxu0
    %v1168 = vadd.f32 0.0, %v1167
    %v1169 = vpop.f32.mrb[0].mxu0
    %1170 = vdwg.mxu0
    %v1171 = vmul.f32 %v1168, %v1168
    %1172 = vadd.xlane.f32.xlu0 %v1171
    %v1173 = vpop.xlane.xlu0 %1172
    %v1174 = vrot.slane %v1173, 4
    %v1175 = vadd.f32 %v1173, %v1174
    %v1176 = vrot.slane %v1175, 2
    %v1177 = vadd.f32 %v1175, %v1176
    %v1178 = vrot.slane %v1177, 1
    %v1179 = vadd.f32 %v1177, %v1178
    %s1180 = vtos %v1179
    %v1181 = vstv %s1180
    %v1182 = vrcp.pop %v1181
    %s1183 = vtos %v1182
    %s1184 = smul.f32 %s1093, %s1183
    %v1185 = vstv %s1184
    %v1186 = vmul.f32 %v1185, %v1100
    %v1187 = vadd.f32 %v1011, %v1186
    %v1188 = vmul.f32 %v1185, %v1168
    %v1189 = vsub.f32 %v1013, %v1188
    %1190 = vmatprep.subr.mxu0 0.0
    %1191 = vmatpush1.msra.mxu0 %v52
    %1192 = vmatprep.subr.mxu0 0.0
    %1193 = vmatpush1.msra.mxu0 %v53
    %1194 = vmatprep.subr.mxu0 0.0
    %1195 = vmatpush1.msra.mxu0 %v54
    %1196 = vmatprep.subr.mxu0 0.0
    %1197 = vmatpush1.msra.mxu0 %v55
    %1198 = vmatprep.subr.mxu0 0.0
    %1199 = vmatpush1.msra.mxu0 %v56
    %1200 = vmatprep.subr.mxu0 0.0
    %1201 = vmatpush1.msra.mxu0 %v57
    %1202 = vmatprep.subr.mxu0 0.0
    %1203 = vmatpush1.msra.mxu0 %v58
    %1204 = vmatprep.subr.mxu0 0.0
    %1205 = vmatpush1.msra.mxu0 %v59
    %1206 = vmatprep.subr.mxu0 0.0
    %1207 = vmatpush1.msra.mxu0 %v60
    %1208 = vmatprep.subr.mxu0 0.0
    %1209 = vmatpush1.msra.mxu0 %v61
    %1210 = vmatprep.subr.mxu0 0.0
    %1211 = vmatpush1.msra.mxu0 %v62
    %1212 = vmatprep.subr.mxu0 0.0
    %1213 = vmatpush1.msra.mxu0 %v63
    %1214 = vmatprep.subr.mxu0 0.0
    %1215 = vmatpush1.msra.mxu0 %v64
    %1216 = vmatprep.subr.mxu0 0.0
    %1217 = vmatpush1.msra.mxu0 %v65
    %1218 = vmatprep.subr.mxu0 0.0
    %1219 = vmatpush1.msra.mxu0 %v66
    %1220 = vmatprep.subr.mxu0 0.0
    %1221 = vmatpush1.msra.mxu0 %v67
    %1222 = vmatprep.subr.mxu0 0.0
    %1223 = vmatpush1.msra.mxu0 0.0
    %1224 = vmatprep.subr.mxu0 0.0
    %1225 = vmatpush1.msra.mxu0 0.0
    %1226 = vmatprep.subr.mxu0 0.0
    %1227 = vmatpush1.msra.mxu0 0.0
    %1228 = vmatprep.subr.mxu0 0.0
    %1229 = vmatpush1.msra.mxu0 0.0
    %1230 = vmatprep.subr.mxu0 0.0
    %1231 = vmatpush1.msra.mxu0 0.0
    %1232 = vmatprep.subr.mxu0 0.0
    %1233 = vmatpush1.msra.mxu0 0.0
    %1234 = vmatprep.subr.mxu0 0.0
    %1235 = vmatpush1.msra.mxu0 0.0
    %1236 = vmatprep.subr.mxu0 0.0
    %1237 = vmatpush1.msra.mxu0 0.0
    %1238 = vmatprep.subr.mxu0 0.0
    %1239 = vmatpush1.msra.mxu0 0.0
    %1240 = vmatprep.subr.mxu0 0.0
    %1241 = vmatpush1.msra.mxu0 0.0
    %1242 = vmatprep.subr.mxu0 0.0
    %1243 = vmatpush1.msra.mxu0 0.0
    %1244 = vmatprep.subr.mxu0 0.0
    %1245 = vmatpush1.msra.mxu0 0.0
    %1246 = vmatprep.subr.mxu0 0.0
    %1247 = vmatpush1.msra.mxu0 0.0
    %1248 = vmatprep.subr.mxu0 0.0
    %1249 = vmatpush1.msra.mxu0 0.0
    %1250 = vmatprep.subr.mxu0 0.0
    %1251 = vmatpush1.msra.mxu0 0.0
    %1252 = vmatprep.subr.mxu0 0.0
    %1253 = vmatpush1.msra.mxu0 0.0
    %1254 = vmatprep.mubr.f32.mxu0 0.0
    %1255 = vmatmul.mubr.f32.gmra.mrb[0].mxu0 %v1189
    %v1256 = vpop.f32.mrb[0].mxu0
    %v1257 = vadd.f32 0.0, %v1256
    %v1258 = vpop.f32.mrb[0].mxu0
    %1259 = vdwg.mxu0
    %v1260 = vmul.f32 %v1257, %v1257
    %1261 = vadd.xlane.f32.xlu0 %v1260
    %v1262 = vpop.xlane.xlu0 %1261
    %v1263 = vrot.slane %v1262, 4
    %v1264 = vadd.f32 %v1262, %v1263
    %v1265 = vrot.slane %v1264, 2
    %v1266 = vadd.f32 %v1264, %v1265
    %v1267 = vrot.slane %v1266, 1
    %v1268 = vadd.f32 %v1266, %v1267
    %s1269 = vtos %v1268
    %v1270 = vstv %s1093
    %v1271 = vrcp.pop %v1270
    %s1272 = vtos %v1271
    %s1273 = smul.f32 %s1269, %s1272
    %v1274 = vstv %s1273
    %v1275 = vmul.f32 %v1274, %v1100
    %v1276 = vadd.f32 %v1257, %v1275
    %1277 = vmatprep.subr.mxu0 0.0
    %1278 = vmatpush1.xpose.msra.mxu0 %v52
    %1279 = vmatprep.subr.mxu0 0.0
    %1280 = vmatpush1.xpose.msra.mxu0 %v53
    %1281 = vmatprep.subr.mxu0 0.0
    %1282 = vmatpush1.xpose.msra.mxu0 %v54
    %1283 = vmatprep.subr.mxu0 0.0
    %1284 = vmatpush1.xpose.msra.mxu0 %v55
    %1285 = vmatprep.subr.mxu0 0.0
    %1286 = vmatpush1.xpose.msra.mxu0 %v56
    %1287 = vmatprep.subr.mxu0 0.0
    %1288 = vmatpush1.xpose.msra.mxu0 %v57
    %1289 = vmatprep.subr.mxu0 0.0
    %1290 = vmatpush1.xpose.msra.mxu0 %v58
    %1291 = vmatprep.subr.mxu0 0.0
    %1292 = vmatpush1.xpose.msra.mxu0 %v59
    %1293 = vmatprep.subr.mxu0 0.0
    %1294 = vmatpush1.xpose.msra.mxu0 %v60
    %1295 = vmatprep.subr.mxu0 0.0
    %1296 = vmatpush1.xpose.msra.mxu0 %v61
    %1297 = vmatprep.subr.mxu0 0.0
    %1298 = vmatpush1.xpose.msra.mxu0 %v62
    %1299 = vmatprep.subr.mxu0 0.0
    %1300 = vmatpush1.xpose.msra.mxu0 %v63
    %1301 = vmatprep.subr.mxu0 0.0
    %1302 = vmatpush1.xpose.msra.mxu0 %v64
    %1303 = vmatprep.subr.mxu0 0.0
    %1304 = vmatpush1.xpose.msra.mxu0 %v65
    %1305 = vmatprep.subr.mxu0 0.0
    %1306 = vmatpush1.xpose.msra.mxu0 %v66
    %1307 = vmatprep.subr.mxu0 0.0
    %1308 = vmatpush1.xpose.msra.mxu0 %v67
    %1309 = vmatprep.subr.mxu0 0.0
    %1310 = vmatpush1.xpose.msra.mxu0 0.0
    %1311 = vmatprep.subr.mxu0 0.0
    %1312 = vmatpush1.xpose.msra.mxu0 0.0
    %1313 = vmatprep.subr.mxu0 0.0
    %1314 = vmatpush1.xpose.msra.mxu0 0.0
    %1315 = vmatprep.subr.mxu0 0.0
    %1316 = vmatpush1.xpose.msra.mxu0 0.0
    %1317 = vmatprep.subr.mxu0 0.0
    %1318 = vmatpush1.xpose.msra.mxu0 0.0
    %1319 = vmatprep.subr.mxu0 0.0
    %1320 = vmatpush1.xpose.msra.mxu0 0.0
    %1321 = vmatprep.subr.mxu0 0.0
    %1322 = vmatpush1.xpose.msra.mxu0 0.0
    %1323 = vmatprep.subr.mxu0 0.0
    %1324 = vmatpush1.xpose.msra.mxu0 0.0
    %1325 = vmatprep.subr.mxu0 0.0
    %1326 = vmatpush1.xpose.msra.mxu0 0.0
    %1327 = vmatprep.subr.mxu0 0.0
    %1328 = vmatpush1.xpose.msra.mxu0 0.0
    %1329 = vmatprep.subr.mxu0 0.0
    %1330 = vmatpush1.xpose.msra.mxu0 0.0
    %1331 = vmatprep.subr.mxu0 0.0
    %1332 = vmatpush1.xpose.msra.mxu0 0.0
    %1333 = vmatprep.subr.mxu0 0.0
    %1334 = vmatpush1.xpose.msra.mxu0 0.0
    %1335 = vmatprep.subr.mxu0 0.0
    %1336 = vmatpush1.xpose.msra.mxu0 0.0
    %1337 = vmatprep.subr.mxu0 0.0
    %1338 = vmatpush1.xpose.msra.mxu0 0.0
    %1339 = vmatprep.subr.mxu0 0.0
    %1340 = vmatpush1.xpose.msra.mxu0 0.0
    %1341 = vmatprep.mubr.f32.mxu0 0.0
    %1342 = vmatmul.mubr.f32.gmra.mrb[0].mxu0 %v1276
    %v1343 = vpop.f32.mrb[0].mxu0
    %v1344 = vadd.f32 0.0, %v1343
    %v1345 = vpop.f32.mrb[0].mxu0
    %1346 = vdwg.mxu0
    %v1347 = vmul.f32 %v1344, %v1344
    %1348 = vadd.xlane.f32.xlu0 %v1347
    %v1349 = vpop.xlane.xlu0 %1348
    %v1350 = vrot.slane %v1349, 4
    %v1351 = vadd.f32 %v1349, %v1350
    %v1352 = vrot.slane %v1351, 2
    %v1353 = vadd.f32 %v1351, %v1352
    %v1354 = vrot.slane %v1353, 1
    %v1355 = vadd.f32 %v1353, %v1354
    %s1356 = vtos %v1355
    %v1357 = vstv %s1356
    %v1358 = vrcp.pop %v1357
    %s1359 = vtos %v1358
    %s1360 = smul.f32 %s1269, %s1359
    %v1361 = vstv %s1360
    %v1362 = vmul.f32 %v1361, %v1276
    %v1363 = vadd.f32 %v1187, %v1362
    %v1364 = vmul.f32 %v1361, %v1344
    %v1365 = vsub.f32 %v1189, %v1364
    %1366 = vmatprep.subr.mxu0 0.0
    %1367 = vmatpush1.msra.mxu0 %v52
    %1368 = vmatprep.subr.mxu0 0.0
    %1369 = vmatpush1.msra.mxu0 %v53
    %1370 = vmatprep.subr.mxu0 0.0
    %1371 = vmatpush1.msra.mxu0 %v54
    %1372 = vmatprep.subr.mxu0 0.0
    %1373 = vmatpush1.msra.mxu0 %v55
    %1374 = vmatprep.subr.mxu0 0.0
    %1375 = vmatpush1.msra.mxu0 %v56
    %1376 = vmatprep.subr.mxu0 0.0
    %1377 = vmatpush1.msra.mxu0 %v57
    %1378 = vmatprep.subr.mxu0 0.0
    %1379 = vmatpush1.msra.mxu0 %v58
    %1380 = vmatprep.subr.mxu0 0.0
    %1381 = vmatpush1.msra.mxu0 %v59
    %1382 = vmatprep.subr.mxu0 0.0
    %1383 = vmatpush1.msra.mxu0 %v60
    %1384 = vmatprep.subr.mxu0 0.0
    %1385 = vmatpush1.msra.mxu0 %v61
    %1386 = vmatprep.subr.mxu0 0.0
    %1387 = vmatpush1.msra.mxu0 %v62
    %1388 = vmatprep.subr.mxu0 0.0
    %1389 = vmatpush1.msra.mxu0 %v63
    %1390 = vmatprep.subr.mxu0 0.0
    %1391 = vmatpush1.msra.mxu0 %v64
    %1392 = vmatprep.subr.mxu0 0.0
    %1393 = vmatpush1.msra.mxu0 %v65
    %1394 = vmatprep.subr.mxu0 0.0
    %1395 = vmatpush1.msra.mxu0 %v66
    %1396 = vmatprep.subr.mxu0 0.0
    %1397 = vmatpush1.msra.mxu0 %v67
    %1398 = vmatprep.subr.mxu0 0.0
    %1399 = vmatpush1.msra.mxu0 0.0
    %1400 = vmatprep.subr.mxu0 0.0
    %1401 = vmatpush1.msra.mxu0 0.0
    %1402 = vmatprep.subr.mxu0 0.0
    %1403 = vmatpush1.msra.mxu0 0.0
    %1404 = vmatprep.subr.mxu0 0.0
    %1405 = vmatpush1.msra.mxu0 0.0
    %1406 = vmatprep.subr.mxu0 0.0
    %1407 = vmatpush1.msra.mxu0 0.0
    %1408 = vmatprep.subr.mxu0 0.0
    %1409 = vmatpush1.msra.mxu0 0.0
    %1410 = vmatprep.subr.mxu0 0.0
    %1411 = vmatpush1.msra.mxu0 0.0
    %1412 = vmatprep.subr.mxu0 0.0
    %1413 = vmatpush1.msra.mxu0 0.0
    %1414 = vmatprep.subr.mxu0 0.0
    %1415 = vmatpush1.msra.mxu0 0.0
    %1416 = vmatprep.subr.mxu0 0.0
    %1417 = vmatpush1.msra.mxu0 0.0
    %1418 = vmatprep.subr.mxu0 0.0
    %1419 = vmatpush1.msra.mxu0 0.0
    %1420 = vmatprep.subr.mxu0 0.0
    %1421 = vmatpush1.msra.mxu0 0.0
    %1422 = vmatprep.subr.mxu0 0.0
    %1423 = vmatpush1.msra.mxu0 0.0
    %1424 = vmatprep.subr.mxu0 0.0
    %1425 = vmatpush1.msra.mxu0 0.0
    %1426 = vmatprep.subr.mxu0 0.0
    %1427 = vmatpush1.msra.mxu0 0.0
    %1428 = vmatprep.subr.mxu0 0.0
    %1429 = vmatpush1.msra.mxu0 0.0
    %1430 = vmatprep.mubr.f32.mxu0 0.0
    %1431 = vmatmul.mubr.f32.gmra.mrb[0].mxu0 %v1365
    %v1432 = vpop.f32.mrb[0].mxu0
    %v1433 = vadd.f32 0.0, %v1432
    %v1434 = vpop.f32.mrb[0].mxu0
    %1435 = vdwg.mxu0
    %v1436 = vmul.f32 %v1433, %v1433
    %1437 = vadd.xlane.f32.xlu0 %v1436
    %v1438 = vpop.xlane.xlu0 %1437
    %v1439 = vrot.slane %v1438, 4
    %v1440 = vadd.f32 %v1438, %v1439
    %v1441 = vrot.slane %v1440, 2
    %v1442 = vadd.f32 %v1440, %v1441
    %v1443 = vrot.slane %v1442, 1
    %v1444 = vadd.f32 %v1442, %v1443
    %s1445 = vtos %v1444
    %v1446 = vstv %s1269
    %v1447 = vrcp.pop %v1446
    %s1448 = vtos %v1447
    %s1449 = smul.f32 %s1445, %s1448
    %v1450 = vstv %s1449
    %v1451 = vmul.f32 %v1450, %v1276
    %v1452 = vadd.f32 %v1433, %v1451
    %1453 = vmatprep.subr.mxu0 0.0
    %1454 = vmatpush1.xpose.msra.mxu0 %v52
    %1455 = vmatprep.subr.mxu0 0.0
    %1456 = vmatpush1.xpose.msra.mxu0 %v53
    %1457 = vmatprep.subr.mxu0 0.0
    %1458 = vmatpush1.xpose.msra.mxu0 %v54
    %1459 = vmatprep.subr.mxu0 0.0
    %1460 = vmatpush1.xpose.msra.mxu0 %v55
    %1461 = vmatprep.subr.mxu0 0.0
    %1462 = vmatpush1.xpose.msra.mxu0 %v56
    %1463 = vmatprep.subr.mxu0 0.0
    %1464 = vmatpush1.xpose.msra.mxu0 %v57
    %1465 = vmatprep.subr.mxu0 0.0
    %1466 = vmatpush1.xpose.msra.mxu0 %v58
    %1467 = vmatprep.subr.mxu0 0.0
    %1468 = vmatpush1.xpose.msra.mxu0 %v59
    %1469 = vmatprep.subr.mxu0 0.0
    %1470 = vmatpush1.xpose.msra.mxu0 %v60
    %1471 = vmatprep.subr.mxu0 0.0
    %1472 = vmatpush1.xpose.msra.mxu0 %v61
    %1473 = vmatprep.subr.mxu0 0.0
    %1474 = vmatpush1.xpose.msra.mxu0 %v62
    %1475 = vmatprep.subr.mxu0 0.0
    %1476 = vmatpush1.xpose.msra.mxu0 %v63
    %1477 = vmatprep.subr.mxu0 0.0
    %1478 = vmatpush1.xpose.msra.mxu0 %v64
    %1479 = vmatprep.subr.mxu0 0.0
    %1480 = vmatpush1.xpose.msra.mxu0 %v65
    %1481 = vmatprep.subr.mxu0 0.0
    %1482 = vmatpush1.xpose.msra.mxu0 %v66
    %1483 = vmatprep.subr.mxu0 0.0
    %1484 = vmatpush1.xpose.msra.mxu0 %v67
    %1485 = vmatprep.subr.mxu0 0.0
    %1486 = vmatpush1.xpose.msra.mxu0 0.0
    %1487 = vmatprep.subr.mxu0 0.0
    %1488 = vmatpush1.xpose.msra.mxu0 0.0
    %1489 = vmatprep.subr.mxu0 0.0
    %1490 = vmatpush1.xpose.msra.mxu0 0.0
    %1491 = vmatprep.subr.mxu0 0.0
    %1492 = vmatpush1.xpose.msra.mxu0 0.0
    %1493 = vmatprep.subr.mxu0 0.0
    %1494 = vmatpush1.xpose.msra.mxu0 0.0
    %1495 = vmatprep.subr.mxu0 0.0
    %1496 = vmatpush1.xpose.msra.mxu0 0.0
    %1497 = vmatprep.subr.mxu0 0.0
    %1498 = vmatpush1.xpose.msra.mxu0 0.0
    %1499 = vmatprep.subr.mxu0 0.0
    %1500 = vmatpush1.xpose.msra.mxu0 0.0
    %1501 = vmatprep.subr.mxu0 0.0
    %1502 = vmatpush1.xpose.msra.mxu0 0.0
    %1503 = vmatprep.subr.mxu0 0.0
    %1504 = vmatpush1.xpose.msra.mxu0 0.0
    %1505 = vmatprep.subr.mxu0 0.0
    %1506 = vmatpush1.xpose.msra.mxu0 0.0
    %1507 = vmatprep.subr.mxu0 0.0
    %1508 = vmatpush1.xpose.msra.mxu0 0.0
    %1509 = vmatprep.subr.mxu0 0.0
    %1510 = vmatpush1.xpose.msra.mxu0 0.0
    %1511 = vmatprep.subr.mxu0 0.0
    %1512 = vmatpush1.xpose.msra.mxu0 0.0
    %1513 = vmatprep.subr.mxu0 0.0
    %1514 = vmatpush1.xpose.msra.mxu0 0.0
    %1515 = vmatprep.subr.mxu0 0.0
    %1516 = vmatpush1.xpose.msra.mxu0 0.0
    %1517 = vmatprep.mubr.f32.mxu0 0.0
    %1518 = vmatmul.mubr.f32.gmra.mrb[0].mxu0 %v1452
    %v1519 = vpop.f32.mrb[0].mxu0
    %v1520 = vadd.f32 0.0, %v1519
    %v1521 = vpop.f32.mrb[0].mxu0
    %1522 = vdwg.mxu0
    %v1523 = vmul.f32 %v1520, %v1520
    %1524 = vadd.xlane.f32.xlu0 %v1523
    %v1525 = vpop.xlane.xlu0 %1524
    %v1526 = vrot.slane %v1525, 4
    %v1527 = vadd.f32 %v1525, %v1526
    %v1528 = vrot.slane %v1527, 2
    %v1529 = vadd.f32 %v1527, %v1528
    %v1530 = vrot.slane %v1529, 1
    %v1531 = vadd.f32 %v1529, %v1530
    %s1532 = vtos %v1531
    %v1533 = vstv %s1532
    %v1534 = vrcp.pop %v1533
    %s1535 = vtos %v1534
    %s1536 = smul.f32 %s1445, %s1535
    %v1537 = vstv %s1536
    %v1538 = vmul.f32 %v1537, %v1452
    %v1539 = vadd.f32 %v1363, %v1538
    %v1540 = vmul.f32 %v1537, %v1520
    %v1541 = vsub.f32 %v1365, %v1540
    %1542 = vmatprep.subr.mxu0 0.0
    %1543 = vmatpush1.msra.mxu0 %v52
    %1544 = vmatprep.subr.mxu0 0.0
    %1545 = vmatpush1.msra.mxu0 %v53
    %1546 = vmatprep.subr.mxu0 0.0
    %1547 = vmatpush1.msra.mxu0 %v54
    %1548 = vmatprep.subr.mxu0 0.0
    %1549 = vmatpush1.msra.mxu0 %v55
    %1550 = vmatprep.subr.mxu0 0.0
    %1551 = vmatpush1.msra.mxu0 %v56
    %1552 = vmatprep.subr.mxu0 0.0
    %1553 = vmatpush1.msra.mxu0 %v57
    %1554 = vmatprep.subr.mxu0 0.0
    %1555 = vmatpush1.msra.mxu0 %v58
    %1556 = vmatprep.subr.mxu0 0.0
    %1557 = vmatpush1.msra.mxu0 %v59
    %1558 = vmatprep.subr.mxu0 0.0
    %1559 = vmatpush1.msra.mxu0 %v60
    %1560 = vmatprep.subr.mxu0 0.0
    %1561 = vmatpush1.msra.mxu0 %v61
    %1562 = vmatprep.subr.mxu0 0.0
    %1563 = vmatpush1.msra.mxu0 %v62
    %1564 = vmatprep.subr.mxu0 0.0
    %1565 = vmatpush1.msra.mxu0 %v63
    %1566 = vmatprep.subr.mxu0 0.0
    %1567 = vmatpush1.msra.mxu0 %v64
    %1568 = vmatprep.subr.mxu0 0.0
    %1569 = vmatpush1.msra.mxu0 %v65
    %1570 = vmatprep.subr.mxu0 0.0
    %1571 = vmatpush1.msra.mxu0 %v66
    %1572 = vmatprep.subr.mxu0 0.0
    %1573 = vmatpush1.msra.mxu0 %v67
    %1574 = vmatprep.subr.mxu0 0.0
    %1575 = vmatpush1.msra.mxu0 0.0
    %1576 = vmatprep.subr.mxu0 0.0
    %1577 = vmatpush1.msra.mxu0 0.0
    %1578 = vmatprep.subr.mxu0 0.0
    %1579 = vmatpush1.msra.mxu0 0.0
    %1580 = vmatprep.subr.mxu0 0.0
    %1581 = vmatpush1.msra.mxu0 0.0
    %1582 = vmatprep.subr.mxu0 0.0
    %1583 = vmatpush1.msra.mxu0 0.0
    %1584 = vmatprep.subr.mxu0 0.0
    %1585 = vmatpush1.msra.mxu0 0.0
    %1586 = vmatprep.subr.mxu0 0.0
    %1587 = vmatpush1.msra.mxu0 0.0
    %1588 = vmatprep.subr.mxu0 0.0
    %1589 = vmatpush1.msra.mxu0 0.0
    %1590 = vmatprep.subr.mxu0 0.0
    %1591 = vmatpush1.msra.mxu0 0.0
    %1592 = vmatprep.subr.mxu0 0.0
    %1593 = vmatpush1.msra.mxu0 0.0
    %1594 = vmatprep.subr.mxu0 0.0
    %1595 = vmatpush1.msra.mxu0 0.0
    %1596 = vmatprep.subr.mxu0 0.0
    %1597 = vmatpush1.msra.mxu0 0.0
    %1598 = vmatprep.subr.mxu0 0.0
    %1599 = vmatpush1.msra.mxu0 0.0
    %1600 = vmatprep.subr.mxu0 0.0
    %1601 = vmatpush1.msra.mxu0 0.0
    %1602 = vmatprep.subr.mxu0 0.0
    %1603 = vmatpush1.msra.mxu0 0.0
    %1604 = vmatprep.subr.mxu0 0.0
    %1605 = vmatpush1.msra.mxu0 0.0
    %1606 = vmatprep.mubr.f32.mxu0 0.0
    %1607 = vmatmul.mubr.f32.gmra.mrb[0].mxu0 %v1541
    %v1608 = vpop.f32.mrb[0].mxu0
    %v1609 = vadd.f32 0.0, %v1608
    %v1610 = vpop.f32.mrb[0].mxu0
    %1611 = vdwg.mxu0
    %v1612 = vmul.f32 %v1609, %v1609
    %1613 = vadd.xlane.f32.xlu0 %v1612
    %v1614 = vpop.xlane.xlu0 %1613
    %v1615 = vrot.slane %v1614, 4
    %v1616 = vadd.f32 %v1614, %v1615
    %v1617 = vrot.slane %v1616, 2
    %v1618 = vadd.f32 %v1616, %v1617
    %v1619 = vrot.slane %v1618, 1
    %v1620 = vadd.f32 %v1618, %v1619
    %s1621 = vtos %v1620
    %v1622 = vstv %s1445
    %v1623 = vrcp.pop %v1622
    %s1624 = vtos %v1623
    %s1625 = smul.f32 %s1621, %s1624
    %v1626 = vstv %s1625
    %v1627 = vmul.f32 %v1626, %v1452
    %v1628 = vadd.f32 %v1609, %v1627
    %1629 = vmatprep.subr.mxu0 0.0
    %1630 = vmatpush1.xpose.msra.mxu0 %v52
    %1631 = vmatprep.subr.mxu0 0.0
    %1632 = vmatpush1.xpose.msra.mxu0 %v53
    %1633 = vmatprep.subr.mxu0 0.0
    %1634 = vmatpush1.xpose.msra.mxu0 %v54
    %1635 = vmatprep.subr.mxu0 0.0
    %1636 = vmatpush1.xpose.msra.mxu0 %v55
    %1637 = vmatprep.subr.mxu0 0.0
    %1638 = vmatpush1.xpose.msra.mxu0 %v56
    %1639 = vmatprep.subr.mxu0 0.0
    %1640 = vmatpush1.xpose.msra.mxu0 %v57
    %1641 = vmatprep.subr.mxu0 0.0
    %1642 = vmatpush1.xpose.msra.mxu0 %v58
    %1643 = vmatprep.subr.mxu0 0.0
    %1644 = vmatpush1.xpose.msra.mxu0 %v59
    %1645 = vmatprep.subr.mxu0 0.0
    %1646 = vmatpush1.xpose.msra.mxu0 %v60
    %1647 = vmatprep.subr.mxu0 0.0
    %1648 = vmatpush1.xpose.msra.mxu0 %v61
    %1649 = vmatprep.subr.mxu0 0.0
    %1650 = vmatpush1.xpose.msra.mxu0 %v62
    %1651 = vmatprep.subr.mxu0 0.0
    %1652 = vmatpush1.xpose.msra.mxu0 %v63
    %1653 = vmatprep.subr.mxu0 0.0
    %1654 = vmatpush1.xpose.msra.mxu0 %v64
    %1655 = vmatprep.subr.mxu0 0.0
    %1656 = vmatpush1.xpose.msra.mxu0 %v65
    %1657 = vmatprep.subr.mxu0 0.0
    %1658 = vmatpush1.xpose.msra.mxu0 %v66
    %1659 = vmatprep.subr.mxu0 0.0
    %1660 = vmatpush1.xpose.msra.mxu0 %v67
    %1661 = vmatprep.subr.mxu0 0.0
    %1662 = vmatpush1.xpose.msra.mxu0 0.0
    %1663 = vmatprep.subr.mxu0 0.0
    %1664 = vmatpush1.xpose.msra.mxu0 0.0
    %1665 = vmatprep.subr.mxu0 0.0
    %1666 = vmatpush1.xpose.msra.mxu0 0.0
    %1667 = vmatprep.subr.mxu0 0.0
    %1668 = vmatpush1.xpose.msra.mxu0 0.0
    %1669 = vmatprep.subr.mxu0 0.0
    %1670 = vmatpush1.xpose.msra.mxu0 0.0
    %1671 = vmatprep.subr.mxu0 0.0
    %1672 = vmatpush1.xpose.msra.mxu0 0.0
    %1673 = vmatprep.subr.mxu0 0.0
    %1674 = vmatpush1.xpose.msra.mxu0 0.0
    %1675 = vmatprep.subr.mxu0 0.0
    %1676 = vmatpush1.xpose.msra.mxu0 0.0
    %1677 = vmatprep.subr.mxu0 0.0
    %1678 = vmatpush1.xpose.msra.mxu0 0.0
    %1679 = vmatprep.subr.mxu0 0.0
    %1680 = vmatpush1.xpose.msra.mxu0 0.0
    %1681 = vmatprep.subr.mxu0 0.0
    %1682 = vmatpush1.xpose.msra.mxu0 0.0
    %1683 = vmatprep.subr.mxu0 0.0
    %1684 = vmatpush1.xpose.msra.mxu0 0.0
    %1685 = vmatprep.subr.mxu0 0.0
    %1686 = vmatpush1.xpose.msra.mxu0 0.0
    %1687 = vmatprep.subr.mxu0 0.0
    %1688 = vmatpush1.xpose.msra.mxu0 0.0
    %1689 = vmatprep.subr.mxu0 0.0
    %1690 = vmatpush1.xpose.msra.mxu0 0.0
    %1691 = vmatprep.subr.mxu0 0.0
    %1692 = vmatpush1.xpose.msra.mxu0 0.0
    %1693 = vmatprep.mubr.f32.mxu0 0.0
    %1694 = vmatmul.mubr.f32.gmra.mrb[0].mxu0 %v1628
    %v1695 = vpop.f32.mrb[0].mxu0
    %v1696 = vadd.f32 0.0, %v1695
    %v1697 = vpop.f32.mrb[0].mxu0
    %1698 = vdwg.mxu0
    %v1699 = vmul.f32 %v1696, %v1696
    %1700 = vadd.xlane.f32.xlu0 %v1699
    %v1701 = vpop.xlane.xlu0 %1700
    %v1702 = vrot.slane %v1701, 4
    %v1703 = vadd.f32 %v1701, %v1702
    %v1704 = vrot.slane %v1703, 2
    %v1705 = vadd.f32 %v1703, %v1704
    %v1706 = vrot.slane %v1705, 1
    %v1707 = vadd.f32 %v1705, %v1706
    %s1708 = vtos %v1707
    %v1709 = vstv %s1708
    %v1710 = vrcp.pop %v1709
    %s1711 = vtos %v1710
    %s1712 = smul.f32 %s1621, %s1711
    %v1713 = vstv %s1712
    %v1714 = vmul.f32 %v1713, %v1628
    %v1715 = vadd.f32 %v1539, %v1714
    %v1716 = vmul.f32 %v1713, %v1696
    %v1717 = vsub.f32 %v1541, %v1716
    %1718 = vmatprep.subr.mxu0 0.0
    %1719 = vmatpush1.msra.mxu0 %v52
    %1720 = vmatprep.subr.mxu0 0.0
    %1721 = vmatpush1.msra.mxu0 %v53
    %1722 = vmatprep.subr.mxu0 0.0
    %1723 = vmatpush1.msra.mxu0 %v54
    %1724 = vmatprep.subr.mxu0 0.0
    %1725 = vmatpush1.msra.mxu0 %v55
    %1726 = vmatprep.subr.mxu0 0.0
    %1727 = vmatpush1.msra.mxu0 %v56
    %1728 = vmatprep.subr.mxu0 0.0
    %1729 = vmatpush1.msra.mxu0 %v57
    %1730 = vmatprep.subr.mxu0 0.0
    %1731 = vmatpush1.msra.mxu0 %v58
    %1732 = vmatprep.subr.mxu0 0.0
    %1733 = vmatpush1.msra.mxu0 %v59
    %1734 = vmatprep.subr.mxu0 0.0
    %1735 = vmatpush1.msra.mxu0 %v60
    %1736 = vmatprep.subr.mxu0 0.0
    %1737 = vmatpush1.msra.mxu0 %v61
    %1738 = vmatprep.subr.mxu0 0.0
    %1739 = vmatpush1.msra.mxu0 %v62
    %1740 = vmatprep.subr.mxu0 0.0
    %1741 = vmatpush1.msra.mxu0 %v63
    %1742 = vmatprep.subr.mxu0 0.0
    %1743 = vmatpush1.msra.mxu0 %v64
    %1744 = vmatprep.subr.mxu0 0.0
    %1745 = vmatpush1.msra.mxu0 %v65
    %1746 = vmatprep.subr.mxu0 0.0
    %1747 = vmatpush1.msra.mxu0 %v66
    %1748 = vmatprep.subr.mxu0 0.0
    %1749 = vmatpush1.msra.mxu0 %v67
    %1750 = vmatprep.subr.mxu0 0.0
    %1751 = vmatpush1.msra.mxu0 0.0
    %1752 = vmatprep.subr.mxu0 0.0
    %1753 = vmatpush1.msra.mxu0 0.0
    %1754 = vmatprep.subr.mxu0 0.0
    %1755 = vmatpush1.msra.mxu0 0.0
    %1756 = vmatprep.subr.mxu0 0.0
    %1757 = vmatpush1.msra.mxu0 0.0
    %1758 = vmatprep.subr.mxu0 0.0
    %1759 = vmatpush1.msra.mxu0 0.0
    %1760 = vmatprep.subr.mxu0 0.0
    %1761 = vmatpush1.msra.mxu0 0.0
    %1762 = vmatprep.subr.mxu0 0.0
    %1763 = vmatpush1.msra.mxu0 0.0
    %1764 = vmatprep.subr.mxu0 0.0
    %1765 = vmatpush1.msra.mxu0 0.0
    %1766 = vmatprep.subr.mxu0 0.0
    %1767 = vmatpush1.msra.mxu0 0.0
    %1768 = vmatprep.subr.mxu0 0.0
    %1769 = vmatpush1.msra.mxu0 0.0
    %1770 = vmatprep.subr.mxu0 0.0
    %1771 = vmatpush1.msra.mxu0 0.0
    %1772 = vmatprep.subr.mxu0 0.0
    %1773 = vmatpush1.msra.mxu0 0.0
    %1774 = vmatprep.subr.mxu0 0.0
    %1775 = vmatpush1.msra.mxu0 0.0
    %1776 = vmatprep.subr.mxu0 0.0
    %1777 = vmatpush1.msra.mxu0 0.0
    %1778 = vmatprep.subr.mxu0 0.0
    %1779 = vmatpush1.msra.mxu0 0.0
    %1780 = vmatprep.subr.mxu0 0.0
    %1781 = vmatpush1.msra.mxu0 0.0
    %1782 = vmatprep.mubr.f32.mxu0 0.0
    %1783 = vmatmul.mubr.f32.gmra.mrb[0].mxu0 %v1717
    %v1784 = vpop.f32.mrb[0].mxu0
    %v1785 = vadd.f32 0.0, %v1784
    %v1786 = vpop.f32.mrb[0].mxu0
    %1787 = vdwg.mxu0
    %v1788 = vmul.f32 %v1785, %v1785
    %1789 = vadd.xlane.f32.xlu0 %v1788
    %v1790 = vpop.xlane.xlu0 %1789
    %v1791 = vrot.slane %v1790, 4
    %v1792 = vadd.f32 %v1790, %v1791
    %v1793 = vrot.slane %v1792, 2
    %v1794 = vadd.f32 %v1792, %v1793
    %v1795 = vrot.slane %v1794, 1
    %v1796 = vadd.f32 %v1794, %v1795
    %s1797 = vtos %v1796
    %v1798 = vstv %s1621
    %v1799 = vrcp.pop %v1798
    %s1800 = vtos %v1799
    %s1801 = smul.f32 %s1797, %s1800
    %v1802 = vstv %s1801
    %v1803 = vmul.f32 %v1802, %v1628
    %v1804 = vadd.f32 %v1785, %v1803
    %1805 = vmatprep.subr.mxu0 0.0
    %1806 = vmatpush1.xpose.msra.mxu0 %v52
    %1807 = vmatprep.subr.mxu0 0.0
    %1808 = vmatpush1.xpose.msra.mxu0 %v53
    %1809 = vmatprep.subr.mxu0 0.0
    %1810 = vmatpush1.xpose.msra.mxu0 %v54
    %1811 = vmatprep.subr.mxu0 0.0
    %1812 = vmatpush1.xpose.msra.mxu0 %v55
    %1813 = vmatprep.subr.mxu0 0.0
    %1814 = vmatpush1.xpose.msra.mxu0 %v56
    %1815 = vmatprep.subr.mxu0 0.0
    %1816 = vmatpush1.xpose.msra.mxu0 %v57
    %1817 = vmatprep.subr.mxu0 0.0
    %1818 = vmatpush1.xpose.msra.mxu0 %v58
    %1819 = vmatprep.subr.mxu0 0.0
    %1820 = vmatpush1.xpose.msra.mxu0 %v59
    %1821 = vmatprep.subr.mxu0 0.0
    %1822 = vmatpush1.xpose.msra.mxu0 %v60
    %1823 = vmatprep.subr.mxu0 0.0
    %1824 = vmatpush1.xpose.msra.mxu0 %v61
    %1825 = vmatprep.subr.mxu0 0.0
    %1826 = vmatpush1.xpose.msra.mxu0 %v62
    %1827 = vmatprep.subr.mxu0 0.0
    %1828 = vmatpush1.xpose.msra.mxu0 %v63
    %1829 = vmatprep.subr.mxu0 0.0
    %1830 = vmatpush1.xpose.msra.mxu0 %v64
    %1831 = vmatprep.subr.mxu0 0.0
    %1832 = vmatpush1.xpose.msra.mxu0 %v65
    %1833 = vmatprep.subr.mxu0 0.0
    %1834 = vmatpush1.xpose.msra.mxu0 %v66
    %1835 = vmatprep.subr.mxu0 0.0
    %1836 = vmatpush1.xpose.msra.mxu0 %v67
    %1837 = vmatprep.subr.mxu0 0.0
    %1838 = vmatpush1.xpose.msra.mxu0 0.0
    %1839 = vmatprep.subr.mxu0 0.0
    %1840 = vmatpush1.xpose.msra.mxu0 0.0
    %1841 = vmatprep.subr.mxu0 0.0
    %1842 = vmatpush1.xpose.msra.mxu0 0.0
    %1843 = vmatprep.subr.mxu0 0.0
    %1844 = vmatpush1.xpose.msra.mxu0 0.0
    %1845 = vmatprep.subr.mxu0 0.0
    %1846 = vmatpush1.xpose.msra.mxu0 0.0
    %1847 = vmatprep.subr.mxu0 0.0
    %1848 = vmatpush1.xpose.msra.mxu0 0.0
    %1849 = vmatprep.subr.mxu0 0.0
    %1850 = vmatpush1.xpose.msra.mxu0 0.0
    %1851 = vmatprep.subr.mxu0 0.0
    %1852 = vmatpush1.xpose.msra.mxu0 0.0
    %1853 = vmatprep.subr.mxu0 0.0
    %1854 = vmatpush1.xpose.msra.mxu0 0.0
    %1855 = vmatprep.subr.mxu0 0.0
    %1856 = vmatpush1.xpose.msra.mxu0 0.0
    %1857 = vmatprep.subr.mxu0 0.0
    %1858 = vmatpush1.xpose.msra.mxu0 0.0
    %1859 = vmatprep.subr.mxu0 0.0
    %1860 = vmatpush1.xpose.msra.mxu0 0.0
    %1861 = vmatprep.subr.mxu0 0.0
    %1862 = vmatpush1.xpose.msra.mxu0 0.0
    %1863 = vmatprep.subr.mxu0 0.0
    %1864 = vmatpush1.xpose.msra.mxu0 0.0
    %1865 = vmatprep.subr.mxu0 0.0
    %1866 = vmatpush1.xpose.msra.mxu0 0.0
    %1867 = vmatprep.subr.mxu0 0.0
    %1868 = vmatpush1.xpose.msra.mxu0 0.0
    %1869 = vmatprep.mubr.f32.mxu0 0.0
    %1870 = vmatmul.mubr.f32.gmra.mrb[0].mxu0 %v1804
    %v1871 = vpop.f32.mrb[0].mxu0
    %v1872 = vadd.f32 0.0, %v1871
    %v1873 = vpop.f32.mrb[0].mxu0
    %1874 = vdwg.mxu0
    %v1875 = vmul.f32 %v1872, %v1872
    %1876 = vadd.xlane.f32.xlu0 %v1875
    %v1877 = vpop.xlane.xlu0 %1876
    %v1878 = vrot.slane %v1877, 4
    %v1879 = vadd.f32 %v1877, %v1878
    %v1880 = vrot.slane %v1879, 2
    %v1881 = vadd.f32 %v1879, %v1880
    %v1882 = vrot.slane %v1881, 1
    %v1883 = vadd.f32 %v1881, %v1882
    %s1884 = vtos %v1883
    %v1885 = vstv %s1884
    %v1886 = vrcp.pop %v1885
    %s1887 = vtos %v1886
    %s1888 = smul.f32 %s1797, %s1887
    %v1889 = vstv %s1888
    %v1890 = vmul.f32 %v1889, %v1804
    %v1891 = vadd.f32 %v1715, %v1890
    %1892 = vst [vmem:[#allocation8] sm:$0xff] %v1891
    // Predicated region
    $region26: #{tpu_custom_call.1} parent=1 // pred_check
      _
    $region27: #{tpu_custom_call.1} parent=1 // pred_check_branch
      %1894 = sbr.rel (0) target = $region29
    $region28: #{tpu_custom_call.1} parent=1 // pred_region
      %s1896 = ssub.s32 128, 128
      %1897 = vsyncadd [#allocation4], %s1896
      %s1899 = sshll.u32 [#allocation8], 4
      %s1900 = int_to_ptr.vmem [resolvable:$true] %s1899
      %1902 = dma.vmem_to_hbm [thread:$0]  %s1900, 128, %s3, [#allocation4]
    $region29: #{tpu_custom_call.1} parent=1 // pred_fallthru
      _
    // Predicated region
    $region30: #{tpu_custom_call.1} parent=1 // pred_check
      _
    $region31: #{tpu_custom_call.1} parent=1 // pred_check_branch
      %1904 = sbr.rel (0) target = $region33
    $region32: #{tpu_custom_call.1} parent=1 // pred_region
      %1905 = dma.done [#allocation4], 128
    $region33: #{tpu_custom_call.1} parent=1 // pred_fallthru
      _
    %1906 = vsyncpa [#allocation3], 1
    %1907 = vsyncpa [#allocation6], 1
    %1908 = vsyncpa [#allocation4], 1

</llo_original>
